<compile_context>
chip_gen: v5e
topology: v5e:2x2
jax: 0.10.0
libtpu: 0.0.40
codegen_flags: <defaults>
</compile_context>

<pallas_src>
import functools

import jax
import jax.numpy as jnp
import numpy as np
from jax.experimental import pallas as pl
from jax.experimental.pallas import tpu as pltpu


def _round8(n):
    return ((n + 7) // 8) * 8


# ----------------------------- fused Pallas kernel ----------------------------- #

def _critic1_kernel(x_ref, wenc_ref, w1g_ref, w2g_ref, w3_ref, b_ref, mask_ref,
                    o_ref, s_ref, *, gx, gy, ch):
    """Shapes:
      x     (L, D)          f32   encoder input, position-major
      wenc  (D, CH)         f32   encoder weight (padded channels zero)
      w1g   (5, 5*CH, CH)   bf16  conv1 weights, one (5*CH, CH) slab per kernel row kh
      w2g   (5, 5*CH, CH)   bf16  conv2 weights, same layout
      w3    (L, CH)         f32   fc3 weight, position-major (padded channels zero)
      b     (4, CH)         f32   rows: [benc, b1, b2, [b3, 0, ...]]
      mask  (L, 5*CH)       f32   merged horizontal (kw) boundary mask; lane block t = kw
      o     (1, 1)          f32
      s     (4*gy+L, 5*CH)  f32   zero-padded, 5x lane-replicated activation scratch
    """
    L = gx * gy
    base = 2 * gy
    f32, bf16 = jnp.float32, jnp.bfloat16

    # Zero the replicated scratch once: its pad rows absorb every vertical (kh)
    # out-of-bounds tap, so no per-tap row masking (and no rolls) is needed.
    s_ref[...] = jnp.zeros_like(s_ref)

    # Encoder: 1x1 Conv1d == per-position channel matmul (tiny K = D dot, kept f32).
    hidden = (jnp.dot(x_ref[...], wenc_ref[...], preferred_element_type=f32)
              + b_ref[0:1, :])                                            # (L, CH)

    mask = mask_ref[...]                                                  # hoisted load

    def stage(act):
        # Store 5 row-shifted copies of the activation, one per lane block t (= kw):
        #   s[r, t*CH:(t+1)*CH] = act[r - (base + 2 - t)]   (zero elsewhere)
        # so a single sublane slice below yields a whole kernel row of taps already
        # concatenated along lanes (vst/vld slots only; no rolls, no lane concats).
        for t in range(5):
            r = base + 2 - t
            s_ref[r:r + L, t * ch:(t + 1) * ch] = act

    def conv5x5_relu(wg_ref, bias_row):
        # 5x5 conv (stride 1, padding 2) as 5 grouped MXU matmuls, one per kernel row:
        #   lhs[p, t*CH + c] = input[(p//gy)+kh-2, (p%gy)+t-2, c]   (0 outside the grid)
        acc = bias_row                                      # (1, CH); broadcasts below
        for kh in range(5):
            r0 = base + (kh - 2) * gy
            lhs = s_ref[r0:r0 + L, :] * mask                # (L, 5*CH), f32 VPU math
            acc = acc + jnp.dot(lhs.astype(bf16), wg_ref[kh],
                                preferred_element_type=f32)
        return jnp.maximum(acc, 0.0)                        # (L, CH)

    stage(hidden)
    out1 = conv5x5_relu(w1g_ref, b_ref[1:2, :])
    stage(out1)                                             # overwrites hidden in place
    out2 = conv5x5_relu(w2g_ref, b_ref[2:3, :])

    # fc3 folded into the epilogue: torch channel-major flatten + Linear(F, 1)
    # == full reduce of out2 * w3_position_major (+ b3); padded channels are zero.
    prod = out2 * w3_ref[...]
    o_ref[...] = (jnp.sum(prod, axis=0, keepdims=True).sum(axis=1, keepdims=True)
                  + b_ref[3:4, 0:1])


def _critic1_pallas_call(gx, gy, ch):
    L = gx * gy
    nr = 4 * gy + L                       # pad rows above/below cover |shift| <= 2*gy+2
    kernel = functools.partial(_critic1_kernel, gx=gx, gy=gy, ch=ch)
    vmem = lambda: pl.BlockSpec(memory_space=pltpu.MemorySpace.VMEM)
    return pl.pallas_call(
        kernel,
        out_shape=jax.ShapeDtypeStruct((1, 1), jnp.float32),
        in_specs=[vmem() for _ in range(7)],
        out_specs=vmem(),
        scratch_shapes=[pltpu.VMEM((nr, 5 * ch), jnp.float32)],
    )


# ------------------------- one-time parameter preparation ---------------------- #

def prepare_params(params, hidden_size, gx, gy):
    """Hoist all weight re-layouts / pads / casts out of the forward path (run once)."""
    L = gx * gy
    f32, bf16 = jnp.float32, jnp.bfloat16
    ch = max(32, _round8(hidden_size))          # lane-friendly padded channel width
    d = params["w_enc"].shape[1]
    cout1 = params["w1"].shape[0]
    cin2, cout2 = params["w2"].shape[1], params["w2"].shape[0]

    # Encoder weight (H, D) -> (D, CH), zero-padded channels, f32.
    wenc = jnp.zeros((d, ch), f32).at[:, :hidden_size].set(params["w_enc"].T)

    # Conv weights (Cout, Cin, 5, 5) -> (5, 5*CH, CH) bf16 for the grouped-K matmuls:
    # slab kh, row index kw*CH + cin, column cout (padded rows/cols are zero).
    def pack_conv(w):
        co, ci = w.shape[0], w.shape[1]
        wt = jnp.transpose(w, (2, 3, 1, 0))                       # (kh, kw, cin, cout)
        buf = jnp.zeros((5, 5, ch, ch), f32).at[:, :, :ci, :co].set(wt)
        return buf.reshape(5, 5 * ch, ch).astype(bf16)

    # Biases packed into one array: rows [benc, b1, b2, [b3, 0...]].
    biases = jnp.zeros((4, ch), f32)
    biases = biases.at[0, :hidden_size].set(params["b_enc"])
    biases = biases.at[1, :cout1].set(params["b1"])
    biases = biases.at[2, :cout2].set(params["b2"])
    biases = biases.at[3, 0].set(params["b3"][0])

    # fc3: torch .view(1, -1) flattens channel-major (flat[c*L + p]) -> re-layout to
    # position-major (L, CH) so the head is an elementwise mul + full XLU reduce.
    w3lp = params["w3"].reshape(cout2, L).T                               # (L, 20)
    w3 = jnp.zeros((L, ch), f32).at[:, :cout2].set(w3lp)

    # Merged horizontal (kw) boundary mask: lane block t == kw, identical over channels.
    m = np.zeros((L, 5 * ch), np.float32)
    for p in range(L):
        j = p % gy
        for t in range(5):
            if 0 <= j + (t - 2) < gy:
                m[p, t * ch:(t + 1) * ch] = 1.0

    return {"wenc": wenc,
            "w1g": pack_conv(params["w1"]),
            "w2g": pack_conv(params["w2"]),
            "w3": w3,
            "biases": biases,
            "mask": jnp.asarray(m)}


# ----------------------------------- forward ----------------------------------- #

@functools.partial(jax.jit, static_argnums=(2, 3, 4))
def critic1_forward(prep, dynamic, hidden_size, grid_x_max, grid_y_max):
    del hidden_size  # carried by the prepared parameter shapes
    ch = prep["biases"].shape[1]
    # TODO(synk): fold this tiny (D, L) -> (L, D) transpose into the kernel via a
    # transposed-LHS lax.dot_general once transposed-operand matmul lowering is
    # verified on all target generations; it is one small XLA op on the latency path.
    x = dynamic[0].T.astype(jnp.float32)                                  # (L, D)
    call = _critic1_pallas_call(grid_x_max, grid_y_max, ch)
    return call(x, prep["wenc"], prep["w1g"], prep["w2g"], prep["w3"],
                prep["biases"], prep["mask"])


# ------------------------------ pure-JAX reference ------------------------------ #

def critic1_reference(params, dynamic, hidden_size, gx, gy):
    """Pure-JAX reference (NCHW convs) for validation."""
    hidden = (jnp.einsum("hd,bdl->bhl", params["w_enc"], dynamic)
              + params["b_enc"][None, :, None])                           # (1, H, L)
    h = hidden.reshape(hidden_size, gx, gy)[None]                         # (1, H, gx, gy)
    o1 = jax.lax.conv_general_dilated(
        h, params["w1"], (1, 1), ((2, 2), (2, 2)),
        dimension_numbers=("NCHW", "OIHW", "NCHW"))
    o1 = jax.nn.relu(o1 + params["b1"][None, :, None, None])
    o2 = jax.lax.conv_general_dilated(
        o1, params["w2"], (1, 1), ((2, 2), (2, 2)),
        dimension_numbers=("NCHW", "OIHW", "NCHW"))
    o2 = jax.nn.relu(o2 + params["b2"][None, :, None, None])
    flat = o2.reshape(1, -1)
    return flat @ params["w3"].T + params["b3"][None, :]


def xavier_uniform(key, shape, fan_in, fan_out):
    bound = float(np.sqrt(6.0 / (fan_in + fan_out)))
    return jax.random.uniform(key, shape, jnp.float32, -bound, bound)


# ------------------------------------- main ------------------------------------- #

if __name__ == "__main__":
    D, H, GX, GY = 4, 32, 8, 8          # dynamic_size, hidden_size, grid_x_max, grid_y_max
    L = GX * GY

    key = jax.random.PRNGKey(0)
    ks = jax.random.split(key, 9)
    params = {
        # Encoder Conv1d(D, H, k=1): weight (H, D, 1) -> stored as (H, D).
        "w_enc": xavier_uniform(ks[0], (H, D), D, H),
        "b_enc": 0.1 * jax.random.normal(ks[1], (H,), jnp.float32),
        # fc1: Conv2d(H, 20, k=5, p=2), weight (20, H, 5, 5).
        "w1": xavier_uniform(ks[2], (20, H, 5, 5), H * 25, 20 * 25),
        "b1": 0.1 * jax.random.normal(ks[3], (20,), jnp.float32),
        # fc2: Conv2d(20, 20, k=5, p=2), weight (20, 20, 5, 5).
        "w2": xavier_uniform(ks[4], (20, 20, 5, 5), 20 * 25, 20 * 25),
        "b2": 0.1 * jax.random.normal(ks[5], (20,), jnp.float32),
        # fc3: Linear(20 * gx * gy, 1).
        "w3": xavier_uniform(ks[6], (1, 20 * L), 20 * L, 1),
        "b3": 0.1 * jax.random.normal(ks[7], (1,), jnp.float32),
    }

    dynamic = jax.random.normal(ks[8], (1, D, L), jnp.float32)   # (batch=1, D, seq=gx*gy)

    prep = prepare_params(params, H, GX, GY)                     # one-time weight re-layout
    out = critic1_forward(prep, dynamic, H, GX, GY)
    out = jax.block_until_ready(out)
    assert out.shape == (1, 1)

    ref = critic1_reference(params, dynamic, H, GX, GY)
    # Tolerance sized for bf16 MXU operands with f32 accumulation; layout/mask bugs
    # would produce errors orders of magnitude larger than this.
    np.testing.assert_allclose(np.asarray(out), np.asarray(ref), rtol=3e-2, atol=3e-2)

    print("KERNEL_OK")
</pallas_src>

<mosaic_0001>
module attributes {stable_mosaic.version = 11 : i64} {
  func.func @_critic1_kernel(%arg0: memref<64x4xf32, #tpu.memory_space<vmem>>, %arg1: memref<4x32xf32, #tpu.memory_space<vmem>>, %arg2: memref<5x160x32xbf16, #tpu.memory_space<vmem>>, %arg3: memref<5x160x32xbf16, #tpu.memory_space<vmem>>, %arg4: memref<64x32xf32, #tpu.memory_space<vmem>>, %arg5: memref<4x32xf32, #tpu.memory_space<vmem>>, %arg6: memref<64x160xf32, #tpu.memory_space<vmem>>, %arg7: memref<1x1xf32, #tpu.memory_space<vmem>>, %arg8: memref<96x160xf32, #tpu.memory_space<vmem>>) attributes {dimension_semantics = [], scalar_prefetch = 0 : i64, scratch_operands = 1 : i64, tpu.core_type = #tpu.core_type<tc>} {
    %cst = arith.constant 0.000000e+00 : f32
    %0 = vector.broadcast %cst : f32 to vector<96x160xf32>
    %c0 = arith.constant 0 : index
    %c0_0 = arith.constant 0 : index
    %1 = vector.load %arg8[%c0, %c0_0] : memref<96x160xf32, #tpu.memory_space<vmem>>, vector<96x160xf32>
    tpu.vector_store %arg8[%c0, %c0_0], %0 {strides = array<i32>} : memref<96x160xf32, #tpu.memory_space<vmem>>, vector<96x160xf32>,
    %c0_1 = arith.constant 0 : index
    %c0_2 = arith.constant 0 : index
    %2 = vector.load %arg0[%c0_1, %c0_2] : memref<64x4xf32, #tpu.memory_space<vmem>>, vector<64x4xf32>
    %c0_3 = arith.constant 0 : index
    %c0_4 = arith.constant 0 : index
    %3 = vector.load %arg1[%c0_3, %c0_4] : memref<4x32xf32, #tpu.memory_space<vmem>>, vector<4x32xf32>
    %cst_5 = arith.constant dense<0.000000e+00> : vector<64x32xf32>
    %4 = tpu.matmul %2, %3, %cst_5 {dimension_numbers = #tpu.dot_dimension_numbers<[1], [0], [0], [1], [0, 0, 1, 1], [], []>} : vector<64x4xf32>, vector<4x32xf32>, vector<64x32xf32> -> vector<64x32xf32>
    %c0_6 = arith.constant 0 : index
    %c0_7 = arith.constant 0 : index
    %5 = vector.load %arg5[%c0_6, %c0_7] : memref<4x32xf32, #tpu.memory_space<vmem>>, vector<1x32xf32>
    %6 = vector.broadcast %5 : vector<1x32xf32> to vector<64x32xf32>
    %7 = arith.addf %4, %6 : vector<64x32xf32>
    %c0_8 = arith.constant 0 : index
    %c0_9 = arith.constant 0 : index
    %8 = vector.load %arg6[%c0_8, %c0_9] : memref<64x160xf32, #tpu.memory_space<vmem>>, vector<64x160xf32>
    %c18 = arith.constant 18 : index
    %c0_10 = arith.constant 0 : index
    %9 = vector.load %arg8[%c18, %c0_10] : memref<96x160xf32, #tpu.memory_space<vmem>>, vector<64x32xf32>
    tpu.vector_store %arg8[%c18, %c0_10], %7 {strides = array<i32>} : memref<96x160xf32, #tpu.memory_space<vmem>>, vector<64x32xf32>,
    %c17 = arith.constant 17 : index
    %c32 = arith.constant 32 : index
    %10 = vector.load %arg8[%c17, %c32] : memref<96x160xf32, #tpu.memory_space<vmem>>, vector<64x32xf32>
    tpu.vector_store %arg8[%c17, %c32], %7 {strides = array<i32>} : memref<96x160xf32, #tpu.memory_space<vmem>>, vector<64x32xf32>,
    %c16 = arith.constant 16 : index
    %c64 = arith.constant 64 : index
    %11 = vector.load %arg8[%c16, %c64] : memref<96x160xf32, #tpu.memory_space<vmem>>, vector<64x32xf32>
    tpu.vector_store %arg8[%c16, %c64], %7 {strides = array<i32>} : memref<96x160xf32, #tpu.memory_space<vmem>>, vector<64x32xf32>,
    %c15 = arith.constant 15 : index
    %c96 = arith.constant 96 : index
    %12 = vector.load %arg8[%c15, %c96] : memref<96x160xf32, #tpu.memory_space<vmem>>, vector<64x32xf32>
    tpu.vector_store %arg8[%c15, %c96], %7 {strides = array<i32>} : memref<96x160xf32, #tpu.memory_space<vmem>>, vector<64x32xf32>,
    %c14 = arith.constant 14 : index
    %c128 = arith.constant 128 : index
    %13 = vector.load %arg8[%c14, %c128] : memref<96x160xf32, #tpu.memory_space<vmem>>, vector<64x32xf32>
    tpu.vector_store %arg8[%c14, %c128], %7 {strides = array<i32>} : memref<96x160xf32, #tpu.memory_space<vmem>>, vector<64x32xf32>,
    %c1 = arith.constant 1 : index
    %c0_11 = arith.constant 0 : index
    %14 = vector.load %arg5[%c1, %c0_11] : memref<4x32xf32, #tpu.memory_space<vmem>>, vector<1x32xf32>
    %c0_12 = arith.constant 0 : index
    %c0_13 = arith.constant 0 : index
    %15 = vector.load %arg8[%c0_12, %c0_13] : memref<96x160xf32, #tpu.memory_space<vmem>>, vector<64x160xf32>
    %16 = arith.mulf %15, %8 : vector<64x160xf32>
    %17 = arith.truncf %16 : vector<64x160xf32> to vector<64x160xbf16>
    %c0_14 = arith.constant 0 : index
    %c0_15 = arith.constant 0 : index
    %c0_16 = arith.constant 0 : index
    %18 = vector.load %arg2[%c0_14, %c0_15, %c0_16] : memref<5x160x32xbf16, #tpu.memory_space<vmem>>, vector<1x160x32xbf16>
    %19 = vector.shape_cast %18 : vector<1x160x32xbf16> to vector<160x32xbf16>
    %cst_17 = arith.constant dense<0.000000e+00> : vector<64x32xf32>
    %20 = tpu.matmul %17, %19, %cst_17 {dimension_numbers = #tpu.dot_dimension_numbers<[1], [0], [0], [1], [0, 0, 1, 1], [], []>} : vector<64x160xbf16>, vector<160x32xbf16>, vector<64x32xf32> -> vector<64x32xf32>
    %21 = vector.broadcast %14 : vector<1x32xf32> to vector<64x32xf32>
    %22 = arith.addf %21, %20 : vector<64x32xf32>
    %c8 = arith.constant 8 : index
    %c0_18 = arith.constant 0 : index
    %23 = vector.load %arg8[%c8, %c0_18] : memref<96x160xf32, #tpu.memory_space<vmem>>, vector<64x160xf32>
    %24 = arith.mulf %23, %8 : vector<64x160xf32>
    %25 = arith.truncf %24 : vector<64x160xf32> to vector<64x160xbf16>
    %c1_19 = arith.constant 1 : index
    %c0_20 = arith.constant 0 : index
    %c0_21 = arith.constant 0 : index
    %26 = vector.load %arg2[%c1_19, %c0_20, %c0_21] : memref<5x160x32xbf16, #tpu.memory_space<vmem>>, vector<1x160x32xbf16>
    %27 = vector.shape_cast %26 : vector<1x160x32xbf16> to vector<160x32xbf16>
    %cst_22 = arith.constant dense<0.000000e+00> : vector<64x32xf32>
    %28 = tpu.matmul %25, %27, %cst_22 {dimension_numbers = #tpu.dot_dimension_numbers<[1], [0], [0], [1], [0, 0, 1, 1], [], []>} : vector<64x160xbf16>, vector<160x32xbf16>, vector<64x32xf32> -> vector<64x32xf32>
    %29 = arith.addf %22, %28 : vector<64x32xf32>
    %c16_23 = arith.constant 16 : index
    %c0_24 = arith.constant 0 : index
    %30 = vector.load %arg8[%c16_23, %c0_24] : memref<96x160xf32, #tpu.memory_space<vmem>>, vector<64x160xf32>
    %31 = arith.mulf %30, %8 : vector<64x160xf32>
    %32 = arith.truncf %31 : vector<64x160xf32> to vector<64x160xbf16>
    %c2 = arith.constant 2 : index
    %c0_25 = arith.constant 0 : index
    %c0_26 = arith.constant 0 : index
    %33 = vector.load %arg2[%c2, %c0_25, %c0_26] : memref<5x160x32xbf16, #tpu.memory_space<vmem>>, vector<1x160x32xbf16>
    %34 = vector.shape_cast %33 : vector<1x160x32xbf16> to vector<160x32xbf16>
    %cst_27 = arith.constant dense<0.000000e+00> : vector<64x32xf32>
    %35 = tpu.matmul %32, %34, %cst_27 {dimension_numbers = #tpu.dot_dimension_numbers<[1], [0], [0], [1], [0, 0, 1, 1], [], []>} : vector<64x160xbf16>, vector<160x32xbf16>, vector<64x32xf32> -> vector<64x32xf32>
    %36 = arith.addf %29, %35 : vector<64x32xf32>
    %c24 = arith.constant 24 : index
    %c0_28 = arith.constant 0 : index
    %37 = vector.load %arg8[%c24, %c0_28] : memref<96x160xf32, #tpu.memory_space<vmem>>, vector<64x160xf32>
    %38 = arith.mulf %37, %8 : vector<64x160xf32>
    %39 = arith.truncf %38 : vector<64x160xf32> to vector<64x160xbf16>
    %c3 = arith.constant 3 : index
    %c0_29 = arith.constant 0 : index
    %c0_30 = arith.constant 0 : index
    %40 = vector.load %arg2[%c3, %c0_29, %c0_30] : memref<5x160x32xbf16, #tpu.memory_space<vmem>>, vector<1x160x32xbf16>
    %41 = vector.shape_cast %40 : vector<1x160x32xbf16> to vector<160x32xbf16>
    %cst_31 = arith.constant dense<0.000000e+00> : vector<64x32xf32>
    %42 = tpu.matmul %39, %41, %cst_31 {dimension_numbers = #tpu.dot_dimension_numbers<[1], [0], [0], [1], [0, 0, 1, 1], [], []>} : vector<64x160xbf16>, vector<160x32xbf16>, vector<64x32xf32> -> vector<64x32xf32>
    %43 = arith.addf %36, %42 : vector<64x32xf32>
    %c32_32 = arith.constant 32 : index
    %c0_33 = arith.constant 0 : index
    %44 = vector.load %arg8[%c32_32, %c0_33] : memref<96x160xf32, #tpu.memory_space<vmem>>, vector<64x160xf32>
    %45 = arith.mulf %44, %8 : vector<64x160xf32>
    %46 = arith.truncf %45 : vector<64x160xf32> to vector<64x160xbf16>
    %c4 = arith.constant 4 : index
    %c0_34 = arith.constant 0 : index
    %c0_35 = arith.constant 0 : index
    %47 = vector.load %arg2[%c4, %c0_34, %c0_35] : memref<5x160x32xbf16, #tpu.memory_space<vmem>>, vector<1x160x32xbf16>
    %48 = vector.shape_cast %47 : vector<1x160x32xbf16> to vector<160x32xbf16>
    %cst_36 = arith.constant dense<0.000000e+00> : vector<64x32xf32>
    %49 = tpu.matmul %46, %48, %cst_36 {dimension_numbers = #tpu.dot_dimension_numbers<[1], [0], [0], [1], [0, 0, 1, 1], [], []>} : vector<64x160xbf16>, vector<160x32xbf16>, vector<64x32xf32> -> vector<64x32xf32>
    %50 = arith.addf %43, %49 : vector<64x32xf32>
    %cst_37 = arith.constant 0.000000e+00 : f32
    %51 = vector.broadcast %cst_37 : f32 to vector<64x32xf32>
    %52 = arith.maximumf %50, %51 : vector<64x32xf32>
    %c18_38 = arith.constant 18 : index
    %c0_39 = arith.constant 0 : index
    %53 = vector.load %arg8[%c18_38, %c0_39] : memref<96x160xf32, #tpu.memory_space<vmem>>, vector<64x32xf32>
    tpu.vector_store %arg8[%c18_38, %c0_39], %52 {strides = array<i32>} : memref<96x160xf32, #tpu.memory_space<vmem>>, vector<64x32xf32>,
    %c17_40 = arith.constant 17 : index
    %c32_41 = arith.constant 32 : index
    %54 = vector.load %arg8[%c17_40, %c32_41] : memref<96x160xf32, #tpu.memory_space<vmem>>, vector<64x32xf32>
    tpu.vector_store %arg8[%c17_40, %c32_41], %52 {strides = array<i32>} : memref<96x160xf32, #tpu.memory_space<vmem>>, vector<64x32xf32>,
    %c16_42 = arith.constant 16 : index
    %c64_43 = arith.constant 64 : index
    %55 = vector.load %arg8[%c16_42, %c64_43] : memref<96x160xf32, #tpu.memory_space<vmem>>, vector<64x32xf32>
    tpu.vector_store %arg8[%c16_42, %c64_43], %52 {strides = array<i32>} : memref<96x160xf32, #tpu.memory_space<vmem>>, vector<64x32xf32>,
    %c15_44 = arith.constant 15 : index
    %c96_45 = arith.constant 96 : index
    %56 = vector.load %arg8[%c15_44, %c96_45] : memref<96x160xf32, #tpu.memory_space<vmem>>, vector<64x32xf32>
    tpu.vector_store %arg8[%c15_44, %c96_45], %52 {strides = array<i32>} : memref<96x160xf32, #tpu.memory_space<vmem>>, vector<64x32xf32>,
    %c14_46 = arith.constant 14 : index
    %c128_47 = arith.constant 128 : index
    %57 = vector.load %arg8[%c14_46, %c128_47] : memref<96x160xf32, #tpu.memory_space<vmem>>, vector<64x32xf32>
    tpu.vector_store %arg8[%c14_46, %c128_47], %52 {strides = array<i32>} : memref<96x160xf32, #tpu.memory_space<vmem>>, vector<64x32xf32>,
    %c2_48 = arith.constant 2 : index
    %c0_49 = arith.constant 0 : index
    %58 = vector.load %arg5[%c2_48, %c0_49] : memref<4x32xf32, #tpu.memory_space<vmem>>, vector<1x32xf32>
    %c0_50 = arith.constant 0 : index
    %c0_51 = arith.constant 0 : index
    %59 = vector.load %arg8[%c0_50, %c0_51] : memref<96x160xf32, #tpu.memory_space<vmem>>, vector<64x160xf32>
    %60 = arith.mulf %59, %8 : vector<64x160xf32>
    %61 = arith.truncf %60 : vector<64x160xf32> to vector<64x160xbf16>
    %c0_52 = arith.constant 0 : index
    %c0_53 = arith.constant 0 : index
    %c0_54 = arith.constant 0 : index
    %62 = vector.load %arg3[%c0_52, %c0_53, %c0_54] : memref<5x160x32xbf16, #tpu.memory_space<vmem>>, vector<1x160x32xbf16>
    %63 = vector.shape_cast %62 : vector<1x160x32xbf16> to vector<160x32xbf16>
    %cst_55 = arith.constant dense<0.000000e+00> : vector<64x32xf32>
    %64 = tpu.matmul %61, %63, %cst_55 {dimension_numbers = #tpu.dot_dimension_numbers<[1], [0], [0], [1], [0, 0, 1, 1], [], []>} : vector<64x160xbf16>, vector<160x32xbf16>, vector<64x32xf32> -> vector<64x32xf32>
    %65 = vector.broadcast %58 : vector<1x32xf32> to vector<64x32xf32>
    %66 = arith.addf %65, %64 : vector<64x32xf32>
    %c8_56 = arith.constant 8 : index
    %c0_57 = arith.constant 0 : index
    %67 = vector.load %arg8[%c8_56, %c0_57] : memref<96x160xf32, #tpu.memory_space<vmem>>, vector<64x160xf32>
    %68 = arith.mulf %67, %8 : vector<64x160xf32>
    %69 = arith.truncf %68 : vector<64x160xf32> to vector<64x160xbf16>
    %c1_58 = arith.constant 1 : index
    %c0_59 = arith.constant 0 : index
    %c0_60 = arith.constant 0 : index
    %70 = vector.load %arg3[%c1_58, %c0_59, %c0_60] : memref<5x160x32xbf16, #tpu.memory_space<vmem>>, vector<1x160x32xbf16>
    %71 = vector.shape_cast %70 : vector<1x160x32xbf16> to vector<160x32xbf16>
    %cst_61 = arith.constant dense<0.000000e+00> : vector<64x32xf32>
    %72 = tpu.matmul %69, %71, %cst_61 {dimension_numbers = #tpu.dot_dimension_numbers<[1], [0], [0], [1], [0, 0, 1, 1], [], []>} : vector<64x160xbf16>, vector<160x32xbf16>, vector<64x32xf32> -> vector<64x32xf32>
    %73 = arith.addf %66, %72 : vector<64x32xf32>
    %c16_62 = arith.constant 16 : index
    %c0_63 = arith.constant 0 : index
    %74 = vector.load %arg8[%c16_62, %c0_63] : memref<96x160xf32, #tpu.memory_space<vmem>>, vector<64x160xf32>
    %75 = arith.mulf %74, %8 : vector<64x160xf32>
    %76 = arith.truncf %75 : vector<64x160xf32> to vector<64x160xbf16>
    %c2_64 = arith.constant 2 : index
    %c0_65 = arith.constant 0 : index
    %c0_66 = arith.constant 0 : index
    %77 = vector.load %arg3[%c2_64, %c0_65, %c0_66] : memref<5x160x32xbf16, #tpu.memory_space<vmem>>, vector<1x160x32xbf16>
    %78 = vector.shape_cast %77 : vector<1x160x32xbf16> to vector<160x32xbf16>
    %cst_67 = arith.constant dense<0.000000e+00> : vector<64x32xf32>
    %79 = tpu.matmul %76, %78, %cst_67 {dimension_numbers = #tpu.dot_dimension_numbers<[1], [0], [0], [1], [0, 0, 1, 1], [], []>} : vector<64x160xbf16>, vector<160x32xbf16>, vector<64x32xf32> -> vector<64x32xf32>
    %80 = arith.addf %73, %79 : vector<64x32xf32>
    %c24_68 = arith.constant 24 : index
    %c0_69 = arith.constant 0 : index
    %81 = vector.load %arg8[%c24_68, %c0_69] : memref<96x160xf32, #tpu.memory_space<vmem>>, vector<64x160xf32>
    %82 = arith.mulf %81, %8 : vector<64x160xf32>
    %83 = arith.truncf %82 : vector<64x160xf32> to vector<64x160xbf16>
    %c3_70 = arith.constant 3 : index
    %c0_71 = arith.constant 0 : index
    %c0_72 = arith.constant 0 : index
    %84 = vector.load %arg3[%c3_70, %c0_71, %c0_72] : memref<5x160x32xbf16, #tpu.memory_space<vmem>>, vector<1x160x32xbf16>
    %85 = vector.shape_cast %84 : vector<1x160x32xbf16> to vector<160x32xbf16>
    %cst_73 = arith.constant dense<0.000000e+00> : vector<64x32xf32>
    %86 = tpu.matmul %83, %85, %cst_73 {dimension_numbers = #tpu.dot_dimension_numbers<[1], [0], [0], [1], [0, 0, 1, 1], [], []>} : vector<64x160xbf16>, vector<160x32xbf16>, vector<64x32xf32> -> vector<64x32xf32>
    %87 = arith.addf %80, %86 : vector<64x32xf32>
    %c32_74 = arith.constant 32 : index
    %c0_75 = arith.constant 0 : index
    %88 = vector.load %arg8[%c32_74, %c0_75] : memref<96x160xf32, #tpu.memory_space<vmem>>, vector<64x160xf32>
    %89 = arith.mulf %88, %8 : vector<64x160xf32>
    %90 = arith.truncf %89 : vector<64x160xf32> to vector<64x160xbf16>
    %c4_76 = arith.constant 4 : index
    %c0_77 = arith.constant 0 : index
    %c0_78 = arith.constant 0 : index
    %91 = vector.load %arg3[%c4_76, %c0_77, %c0_78] : memref<5x160x32xbf16, #tpu.memory_space<vmem>>, vector<1x160x32xbf16>
    %92 = vector.shape_cast %91 : vector<1x160x32xbf16> to vector<160x32xbf16>
    %cst_79 = arith.constant dense<0.000000e+00> : vector<64x32xf32>
    %93 = tpu.matmul %90, %92, %cst_79 {dimension_numbers = #tpu.dot_dimension_numbers<[1], [0], [0], [1], [0, 0, 1, 1], [], []>} : vector<64x160xbf16>, vector<160x32xbf16>, vector<64x32xf32> -> vector<64x32xf32>
    %94 = arith.addf %87, %93 : vector<64x32xf32>
    %cst_80 = arith.constant 0.000000e+00 : f32
    %95 = vector.broadcast %cst_80 : f32 to vector<64x32xf32>
    %96 = arith.maximumf %94, %95 : vector<64x32xf32>
    %c0_81 = arith.constant 0 : index
    %c0_82 = arith.constant 0 : index
    %97 = vector.load %arg4[%c0_81, %c0_82] : memref<64x32xf32, #tpu.memory_space<vmem>>, vector<64x32xf32>
    %98 = arith.mulf %96, %97 : vector<64x32xf32>
    %cst_83 = arith.constant dense<0.000000e+00> : vector<32xf32>
    %99 = vector.multi_reduction <add>, %98, %cst_83 [0] : vector<64x32xf32> to vector<32xf32>
    %100 = vector.shape_cast %99 : vector<32xf32> to vector<1x32xf32>
    %cst_84 = arith.constant dense<0.000000e+00> : vector<1xf32>
    %101 = vector.multi_reduction <add>, %100, %cst_84 [1] : vector<1x32xf32> to vector<1xf32>
    %102 = vector.shape_cast %101 : vector<1xf32> to vector<1x1xf32>
    %c3_85 = arith.constant 3 : index
    %c0_86 = arith.constant 0 : index
    %103 = vector.load %arg5[%c3_85, %c0_86] : memref<4x32xf32, #tpu.memory_space<vmem>>, vector<1x1xf32>
    %104 = arith.addf %102, %103 : vector<1x1xf32>
    %c0_87 = arith.constant 0 : index
    %c0_88 = arith.constant 0 : index
    %105 = vector.load %arg7[%c0_87, %c0_88] : memref<1x1xf32, #tpu.memory_space<vmem>>, vector<1x1xf32>
    tpu.vector_store %arg7[%c0_87, %c0_88], %104 {strides = array<i32>} : memref<1x1xf32, #tpu.memory_space<vmem>>, vector<1x1xf32>,
    return
  }
}

</mosaic_0001>

<llo_original>
// kernel: critic1_forward.1
$region0: #{critic1_forward.1}
  #allocation0 [shape = 'u32[]', space=smem, size = 0x4, offset = 0x4, fixed_abs, tag = 'smem constant byte address 0x4 - core index']
  #allocation1 [shape = 'u32[72,128]{1,0:T(1,128)}', space=vmem, size = 0x9000, scoped, tag = 'internal scratch']
  #allocation2 [shape = 'f32[96,160]{1,0:T(8,128)}', space=vmem, size = 0x18000, scoped, tag = 'scratch operand']
  %s0 = inlined_call_operand.vmem [shape: f32[64,4], index: 0, kind: input, shape index: {}]
  %s1 = inlined_call_operand.vmem [shape: f32[4,32], index: 1, kind: input, shape index: {}]
  %s2 = inlined_call_operand.vmem [shape: bf16[5,160,32], index: 2, kind: input, shape index: {}]
  %s3 = inlined_call_operand.vmem [shape: bf16[5,160,32], index: 3, kind: input, shape index: {}]
  %s4 = inlined_call_operand.vmem [shape: f32[64,32], index: 4, kind: input, shape index: {}]
  %s5 = inlined_call_operand.vmem [shape: f32[4,32], index: 5, kind: input, shape index: {}]
  %s6 = inlined_call_operand.vmem [shape: f32[64,160], index: 6, kind: input, shape index: {}]
  %s7 = inlined_call_operand.hbm [shape: f32[1,1], index: 7, kind: output, shape index: {}]
  %s8 = sld [smem:[#allocation0]]
  $region38: #{critic1_forward.1} parent=0
    _
  %s10 = ssub.s32 1, %s8
  %s11 = scalar_select 0, %s10, %s8
  $region1: #{critic1_forward.1} parent=0
    #allocation3 [shape = 'u8[512]{0}', space=vmem, size = 0x400, scoped, tag = 'output window, operand 0, single buffered']
    #allocation4 [shape = 's32[1]{0}', space=sflag, size = 0x4, scoped, tag = 'scoped memory for critic1_forward.1']
    %12 = vsyncpa [#allocation4], 0
    // Predicated region
    $region2: #{critic1_forward.1} parent=1 // pred_check
      _
    $region3: #{critic1_forward.1} parent=1 // pred_check_branch
      %14 = sbr.rel (0) target = $region5
    $region4: #{critic1_forward.1} parent=1 // pred_region
      _
    $region5: #{critic1_forward.1} parent=1 // pred_fallthru
      _
    // Predicated region
    $region6: #{critic1_forward.1} parent=1 // pred_check
      _
    $region7: #{critic1_forward.1} parent=1 // pred_check_branch
      %16 = sbr.rel (0) target = $region9
    $region8: #{critic1_forward.1} parent=1 // pred_region
      _
    $region9: #{critic1_forward.1} parent=1 // pred_fallthru
      _
    // Predicated region
    $region10: #{critic1_forward.1} parent=1 // pred_check
      _
    $region11: #{critic1_forward.1} parent=1 // pred_check_branch
      %18 = sbr.rel (0) target = $region13
    $region12: #{critic1_forward.1} parent=1 // pred_region
      _
    $region13: #{critic1_forward.1} parent=1 // pred_fallthru
      _
    // Predicated region
    $region14: #{critic1_forward.1} parent=1 // pred_check
      _
    $region15: #{critic1_forward.1} parent=1 // pred_check_branch
      %20 = sbr.rel (0) target = $region17
    $region16: #{critic1_forward.1} parent=1 // pred_region
      _
    $region17: #{critic1_forward.1} parent=1 // pred_fallthru
      _
    // Predicated region
    $region18: #{critic1_forward.1} parent=1 // pred_check
      _
    $region19: #{critic1_forward.1} parent=1 // pred_check_branch
      %22 = sbr.rel (0) target = $region21
    $region20: #{critic1_forward.1} parent=1 // pred_region
      _
    $region21: #{critic1_forward.1} parent=1 // pred_fallthru
      _
    // Predicated region
    $region22: #{critic1_forward.1} parent=1 // pred_check
      _
    $region23: #{critic1_forward.1} parent=1 // pred_check_branch
      %24 = sbr.rel (0) target = $region25
    $region24: #{critic1_forward.1} parent=1 // pred_region
      _
    $region25: #{critic1_forward.1} parent=1 // pred_fallthru
      _
    // Predicated region
    $region26: #{critic1_forward.1} parent=1 // pred_check
      _
    $region27: #{critic1_forward.1} parent=1 // pred_check_branch
      %26 = sbr.rel (0) target = $region29
    $region28: #{critic1_forward.1} parent=1 // pred_region
      _
    $region29: #{critic1_forward.1} parent=1 // pred_fallthru
      _
    %28 = vst [vmem:[#allocation2] sm:$0xff] 0.0
    %vm29 = vcmask 261120
    %30 = vst.msk [vmem:[#allocation2 + $0x8] sm:$0xff] %vm29, 0.0
    %31 = vst [vmem:[#allocation2 + $0x10] sm:$0xff] 0.0
    %32 = vst.msk [vmem:[#allocation2 + $0x18] sm:$0xff] %vm29, 0.0
    %33 = vst [vmem:[#allocation2 + $0x20] sm:$0xff] 0.0
    %34 = vst.msk [vmem:[#allocation2 + $0x28] sm:$0xff] %vm29, 0.0
    %35 = vst [vmem:[#allocation2 + $0x30] sm:$0xff] 0.0
    %36 = vst.msk [vmem:[#allocation2 + $0x38] sm:$0xff] %vm29, 0.0
    %37 = vst [vmem:[#allocation2 + $0x40] sm:$0xff] 0.0
    %38 = vst.msk [vmem:[#allocation2 + $0x48] sm:$0xff] %vm29, 0.0
    %39 = vst [vmem:[#allocation2 + $0x50] sm:$0xff] 0.0
    %40 = vst.msk [vmem:[#allocation2 + $0x58] sm:$0xff] %vm29, 0.0
    %41 = vst [vmem:[#allocation2 + $0x60] sm:$0xff] 0.0
    %42 = vst.msk [vmem:[#allocation2 + $0x68] sm:$0xff] %vm29, 0.0
    %43 = vst [vmem:[#allocation2 + $0x70] sm:$0xff] 0.0
    %44 = vst.msk [vmem:[#allocation2 + $0x78] sm:$0xff] %vm29, 0.0
    %45 = vst [vmem:[#allocation2 + $0x80] sm:$0xff] 0.0
    %46 = vst.msk [vmem:[#allocation2 + $0x88] sm:$0xff] %vm29, 0.0
    %47 = vst [vmem:[#allocation2 + $0x90] sm:$0xff] 0.0
    %48 = vst.msk [vmem:[#allocation2 + $0x98] sm:$0xff] %vm29, 0.0
    %49 = vst [vmem:[#allocation2 + $0xa0] sm:$0xff] 0.0
    %50 = vst.msk [vmem:[#allocation2 + $0xa8] sm:$0xff] %vm29, 0.0
    %51 = vst [vmem:[#allocation2 + $0xb0] sm:$0xff] 0.0
    %52 = vst.msk [vmem:[#allocation2 + $0xb8] sm:$0xff] %vm29, 0.0
    %v53 = vld [vmem:[%s0] sm:$0xff]
    %v54 = vld [vmem:[%s0 + $0x8] sm:$0xff]
    %v55 = vld [vmem:[%s0 + $0x10] sm:$0xff]
    %v56 = vld [vmem:[%s0 + $0x18] sm:$0xff]
    %v57 = vld [vmem:[%s0 + $0x20] sm:$0xff]
    %v58 = vld [vmem:[%s0 + $0x28] sm:$0xff]
    %v59 = vld [vmem:[%s0 + $0x30] sm:$0xff]
    %v60 = vld [vmem:[%s0 + $0x38] sm:$0xff]
    %v61 = vld [vmem:[%s1] sm:$0xf]
    %v62 = vld [vmem:[%s5] sm:$0x1]
    %v63 = vperm.slane %v62, 0
    %vm64 = vcmask 31744
    %v66 = vsel %vm64, %v53, 0
    %v69 = vsel %vm64, %v54, 0
    %v72 = vsel %vm64, %v55, 0
    %v75 = vsel %vm64, %v56, 0
    %v78 = vsel %vm64, %v57, 0
    %v81 = vsel %vm64, %v58, 0
    %v84 = vsel %vm64, %v59, 0
    %v87 = vsel %vm64, %v60, 0
    %vm89 = vcmask 1043456
    %v91 = vsel %vm89, %v61, 0
    %93 = vmatpush.msra.mxu0 0.0
    %94 = vmatpush.msra.mxu0 0.0
    %95 = vmatpush.msra.mxu0 0.0
    %96 = vmatpush.msra.mxu0 0.0
    %97 = vmatpush.msra.mxu0 0.0
    %98 = vmatpush.msra.mxu0 0.0
    %99 = vmatpush.msra.mxu0 0.0
    %100 = vmatpush.msra.mxu0 0.0
    %101 = vmatpush.msra.mxu0 0.0
    %102 = vmatpush.msra.mxu0 0.0
    %103 = vmatpush.msra.mxu0 0.0
    %104 = vmatpush.msra.mxu0 0.0
    %105 = vmatpush.msra.mxu0 0.0
    %106 = vmatpush.msra.mxu0 0.0
    %107 = vmatpush.msra.mxu0 0.0
    %108 = vmatpush.msra.mxu0 %v91
    %109 = vmatmul.f32.gmra.mxu0 %v66
    %v110 = vpop.f32.mrf.mxu0
    %v111 = vadd.f32 %v63, %v110
    %112 = vmatmul.f32.gmra.mxu0 %v69
    %v113 = vpop.f32.mrf.mxu0
    %v114 = vadd.f32 %v63, %v113
    %115 = vmatmul.f32.gmra.mxu0 %v72
    %v116 = vpop.f32.mrf.mxu0
    %v117 = vadd.f32 %v63, %v116
    %118 = vmatmul.f32.gmra.mxu0 %v75
    %v119 = vpop.f32.mrf.mxu0
    %v120 = vadd.f32 %v63, %v119
    %121 = vmatmul.f32.gmra.mxu0 %v78
    %v122 = vpop.f32.mrf.mxu0
    %v123 = vadd.f32 %v63, %v122
    %124 = vmatmul.f32.gmra.mxu0 %v81
    %v125 = vpop.f32.mrf.mxu0
    %v126 = vadd.f32 %v63, %v125
    %127 = vmatmul.f32.gmra.mxu0 %v84
    %v128 = vpop.f32.mrf.mxu0
    %v129 = vadd.f32 %v63, %v128
    %130 = vmatmul.f32.gmra.mxu0 %v87
    %v131 = vpop.f32.mrf.mxu0
    %v132 = vadd.f32 %v63, %v131
    %133 = vdwg.mxu0
    %v134 = vld [vmem:[%s6] sm:$0xff]
    %v135 = vld [vmem:[%s6 + $0x8] sm:$0xff]
    %v136 = vld [vmem:[%s6 + $0x10] sm:$0xff]
    %v137 = vld [vmem:[%s6 + $0x18] sm:$0xff]
    %v138 = vld [vmem:[%s6 + $0x20] sm:$0xff]
    %v139 = vld [vmem:[%s6 + $0x28] sm:$0xff]
    %v140 = vld [vmem:[%s6 + $0x30] sm:$0xff]
    %v141 = vld [vmem:[%s6 + $0x38] sm:$0xff]
    %v142 = vld [vmem:[%s6 + $0x40] sm:$0xff]
    %v143 = vld [vmem:[%s6 + $0x48] sm:$0xff]
    %v144 = vld [vmem:[%s6 + $0x50] sm:$0xff]
    %v145 = vld [vmem:[%s6 + $0x58] sm:$0xff]
    %v146 = vld [vmem:[%s6 + $0x60] sm:$0xff]
    %v147 = vld [vmem:[%s6 + $0x68] sm:$0xff]
    %v148 = vld [vmem:[%s6 + $0x70] sm:$0xff]
    %v149 = vld [vmem:[%s6 + $0x78] sm:$0xff]
    %vm158 = vcmask 1041408
    %v159 = vrot.slane %v111, 6
    %v160 = vrot.slane %v114, 6
    %v161 = vsel %vm158, %v159, %v160
    %v162 = vrot.slane %v117, 6
    %v163 = vsel %vm158, %v160, %v162
    %v164 = vrot.slane %v120, 6
    %v165 = vsel %vm158, %v162, %v164
    %v166 = vrot.slane %v123, 6
    %v167 = vsel %vm158, %v164, %v166
    %v168 = vrot.slane %v126, 6
    %v169 = vsel %vm158, %v166, %v168
    %v170 = vrot.slane %v129, 6
    %v171 = vsel %vm158, %v168, %v170
    %v172 = vrot.slane %v132, 6
    %v173 = vsel %vm158, %v170, %v172
    %vm183 = vcmask 261122
    %184 = vst.msk [vmem:[#allocation2 + $0x20] sm:$0xfc] %vm183, %v159
    %185 = vst.msk [vmem:[#allocation2 + $0x30] sm:$0xff] %vm29, %v161
    %186 = vst.msk [vmem:[#allocation2 + $0x40] sm:$0xff] %vm29, %v163
    %187 = vst.msk [vmem:[#allocation2 + $0x50] sm:$0xff] %vm29, %v165
    %188 = vst.msk [vmem:[#allocation2 + $0x60] sm:$0xff] %vm29, %v167
    %189 = vst.msk [vmem:[#allocation2 + $0x70] sm:$0xff] %vm29, %v169
    %190 = vst.msk [vmem:[#allocation2 + $0x80] sm:$0xff] %vm29, %v171
    %191 = vst.msk [vmem:[#allocation2 + $0x90] sm:$0xff] %vm29, %v173
    %vm192 = vcmask 254976
    %193 = vst.msk [vmem:[#allocation2 + $0xa0] sm:$0x3] %vm192, %v172
    %vm194 = vcmask 1040384
    %v195 = vrot.slane %v111, 7
    %v196 = vrot.slane %v114, 7
    %v197 = vsel %vm194, %v195, %v196
    %v198 = vrot.slane %v117, 7
    %v199 = vsel %vm194, %v196, %v198
    %v200 = vrot.slane %v120, 7
    %v201 = vsel %vm194, %v198, %v200
    %v202 = vrot.slane %v123, 7
    %v203 = vsel %vm194, %v200, %v202
    %v204 = vrot.slane %v126, 7
    %v205 = vsel %vm194, %v202, %v204
    %v206 = vrot.slane %v129, 7
    %v207 = vsel %vm194, %v204, %v206
    %v208 = vrot.slane %v132, 7
    %v209 = vsel %vm194, %v206, %v208
    %210 = vrot.lane.b32.xlu0 %v195, 32
    %v211 = vpop.permute.xlu0 %210
    %212 = vrot.lane.b32.xlu0 %v197, 32
    %v213 = vpop.permute.xlu0 %212
    %214 = vrot.lane.b32.xlu0 %v199, 32
    %v215 = vpop.permute.xlu0 %214
    %216 = vrot.lane.b32.xlu0 %v201, 32
    %v217 = vpop.permute.xlu0 %216
    %218 = vrot.lane.b32.xlu0 %v203, 32
    %v219 = vpop.permute.xlu0 %218
    %220 = vrot.lane.b32.xlu0 %v205, 32
    %v221 = vpop.permute.xlu0 %220
    %222 = vrot.lane.b32.xlu0 %v207, 32
    %v223 = vpop.permute.xlu0 %222
    %224 = vrot.lane.b32.xlu0 %v209, 32
    %v225 = vpop.permute.xlu0 %224
    %226 = vrot.lane.b32.xlu0 %v208, 32
    %v227 = vpop.permute.xlu0 %226
    %vm237 = vcmask 523521
    %238 = vst.msk [vmem:[#allocation2 + $0x20] sm:$0xfe] %vm237, %v211
    %vm239 = vcmask 523520
    %240 = vst.msk [vmem:[#allocation2 + $0x30] sm:$0xff] %vm239, %v213
    %241 = vst.msk [vmem:[#allocation2 + $0x40] sm:$0xff] %vm239, %v215
    %242 = vst.msk [vmem:[#allocation2 + $0x50] sm:$0xff] %vm239, %v217
    %243 = vst.msk [vmem:[#allocation2 + $0x60] sm:$0xff] %vm239, %v219
    %244 = vst.msk [vmem:[#allocation2 + $0x70] sm:$0xff] %vm239, %v221
    %245 = vst.msk [vmem:[#allocation2 + $0x80] sm:$0xff] %vm239, %v223
    %246 = vst.msk [vmem:[#allocation2 + $0x90] sm:$0xff] %vm239, %v225
    %vm247 = vcmask 516352
    %248 = vst.msk [vmem:[#allocation2 + $0xa0] sm:$0x1] %vm247, %v227
    %249 = vrot.lane.b32.xlu0 %v111, 64
    %v250 = vpop.permute.xlu0 %249
    %251 = vrot.lane.b32.xlu0 %v114, 64
    %v252 = vpop.permute.xlu0 %251
    %253 = vrot.lane.b32.xlu0 %v117, 64
    %v254 = vpop.permute.xlu0 %253
    %255 = vrot.lane.b32.xlu0 %v120, 64
    %v256 = vpop.permute.xlu0 %255
    %257 = vrot.lane.b32.xlu0 %v123, 64
    %v258 = vpop.permute.xlu0 %257
    %259 = vrot.lane.b32.xlu0 %v126, 64
    %v260 = vpop.permute.xlu0 %259
    %261 = vrot.lane.b32.xlu0 %v129, 64
    %v262 = vpop.permute.xlu0 %261
    %263 = vrot.lane.b32.xlu0 %v132, 64
    %v264 = vpop.permute.xlu0 %263
    %vm273 = vcmask 785920
    %274 = vst.msk [vmem:[#allocation2 + $0x20] sm:$0xff] %vm273, %v250
    %275 = vst.msk [vmem:[#allocation2 + $0x30] sm:$0xff] %vm273, %v252
    %276 = vst.msk [vmem:[#allocation2 + $0x40] sm:$0xff] %vm273, %v254
    %277 = vst.msk [vmem:[#allocation2 + $0x50] sm:$0xff] %vm273, %v256
    %278 = vst.msk [vmem:[#allocation2 + $0x60] sm:$0xff] %vm273, %v258
    %279 = vst.msk [vmem:[#allocation2 + $0x70] sm:$0xff] %vm273, %v260
    %280 = vst.msk [vmem:[#allocation2 + $0x80] sm:$0xff] %vm273, %v262
    %281 = vst.msk [vmem:[#allocation2 + $0x90] sm:$0xff] %vm273, %v264
    %vm282 = vcmask 1046528
    %v283 = vrot.slane %v111, 1
    %v284 = vrot.slane %v114, 1
    %v285 = vsel %vm282, %v283, %v284
    %v286 = vrot.slane %v117, 1
    %v287 = vsel %vm282, %v284, %v286
    %v288 = vrot.slane %v120, 1
    %v289 = vsel %vm282, %v286, %v288
    %v290 = vrot.slane %v123, 1
    %v291 = vsel %vm282, %v288, %v290
    %v292 = vrot.slane %v126, 1
    %v293 = vsel %vm282, %v290, %v292
    %v294 = vrot.slane %v129, 1
    %v295 = vsel %vm282, %v292, %v294
    %v296 = vrot.slane %v132, 1
    %v297 = vsel %vm282, %v294, %v296
    %298 = vrot.lane.b32.xlu0 %v283, 96
    %v299 = vpop.permute.xlu0 %298
    %300 = vrot.lane.b32.xlu0 %v285, 96
    %v301 = vpop.permute.xlu0 %300
    %302 = vrot.lane.b32.xlu0 %v287, 96
    %v303 = vpop.permute.xlu0 %302
    %304 = vrot.lane.b32.xlu0 %v289, 96
    %v305 = vpop.permute.xlu0 %304
    %306 = vrot.lane.b32.xlu0 %v291, 96
    %v307 = vpop.permute.xlu0 %306
    %308 = vrot.lane.b32.xlu0 %v293, 96
    %v309 = vpop.permute.xlu0 %308
    %310 = vrot.lane.b32.xlu0 %v295, 96
    %v311 = vpop.permute.xlu0 %310
    %312 = vrot.lane.b32.xlu0 %v297, 96
    %v313 = vpop.permute.xlu0 %312
    %314 = vrot.lane.b32.xlu0 %v296, 96
    %v315 = vpop.permute.xlu0 %314
    %vm325 = vcmask 1048327
    %326 = vst.msk [vmem:[#allocation2 + $0x10] sm:$0x80] %vm325, %v299
    %vm327 = vcmask 1048320
    %328 = vst.msk [vmem:[#allocation2 + $0x20] sm:$0xff] %vm327, %v301
    %329 = vst.msk [vmem:[#allocation2 + $0x30] sm:$0xff] %vm327, %v303
    %330 = vst.msk [vmem:[#allocation2 + $0x40] sm:$0xff] %vm327, %v305
    %331 = vst.msk [vmem:[#allocation2 + $0x50] sm:$0xff] %vm327, %v307
    %332 = vst.msk [vmem:[#allocation2 + $0x60] sm:$0xff] %vm327, %v309
    %333 = vst.msk [vmem:[#allocation2 + $0x70] sm:$0xff] %vm327, %v311
    %334 = vst.msk [vmem:[#allocation2 + $0x80] sm:$0xff] %vm327, %v313
    %vm335 = vcmask 1047296
    %336 = vst.msk [vmem:[#allocation2 + $0x90] sm:$0x7f] %vm335, %v315
    %vm337 = vcmask 1045504
    %v338 = vrot.slane %v111, 2
    %v339 = vrot.slane %v114, 2
    %v340 = vsel %vm337, %v338, %v339
    %v341 = vrot.slane %v117, 2
    %v342 = vsel %vm337, %v339, %v341
    %v343 = vrot.slane %v120, 2
    %v344 = vsel %vm337, %v341, %v343
    %v345 = vrot.slane %v123, 2
    %v346 = vsel %vm337, %v343, %v345
    %v347 = vrot.slane %v126, 2
    %v348 = vsel %vm337, %v345, %v347
    %v349 = vrot.slane %v129, 2
    %v350 = vsel %vm337, %v347, %v349
    %v351 = vrot.slane %v132, 2
    %v352 = vsel %vm337, %v349, %v351
    %vm362 = vcmask 261126
    %363 = vst.msk [vmem:[#allocation2 + $0x18] sm:$0xc0] %vm362, %v338
    %364 = vst.msk [vmem:[#allocation2 + $0x28] sm:$0xff] %vm29, %v340
    %365 = vst.msk [vmem:[#allocation2 + $0x38] sm:$0xff] %vm29, %v342
    %366 = vst.msk [vmem:[#allocation2 + $0x48] sm:$0xff] %vm29, %v344
    %367 = vst.msk [vmem:[#allocation2 + $0x58] sm:$0xff] %vm29, %v346
    %368 = vst.msk [vmem:[#allocation2 + $0x68] sm:$0xff] %vm29, %v348
    %369 = vst.msk [vmem:[#allocation2 + $0x78] sm:$0xff] %vm29, %v350
    %370 = vst.msk [vmem:[#allocation2 + $0x88] sm:$0xff] %vm29, %v352
    %vm371 = vcmask 259072
    %372 = vst.msk [vmem:[#allocation2 + $0x98] sm:$0x3f] %vm371, %v351
    %v373 = vld [vmem:[%s5 + $0x1] sm:$0x1]
    %v374 = vld [vmem:[#allocation2] sm:$0xff]
    %v375 = vld [vmem:[#allocation2 + $0x8] sm:$0xff]
    %v376 = vld [vmem:[#allocation2 + $0x10] sm:$0xff]
    %v377 = vld [vmem:[#allocation2 + $0x18] sm:$0xff]
    %v378 = vld [vmem:[#allocation2 + $0x20] sm:$0xff]
    %v379 = vld [vmem:[#allocation2 + $0x28] sm:$0xff]
    %v380 = vld [vmem:[#allocation2 + $0x30] sm:$0xff]
    %v381 = vld [vmem:[#allocation2 + $0x38] sm:$0xff]
    %v382 = vld [vmem:[#allocation2 + $0x40] sm:$0xff]
    %v383 = vld [vmem:[#allocation2 + $0x48] sm:$0xff]
    %v384 = vld [vmem:[#allocation2 + $0x50] sm:$0xff]
    %v385 = vld [vmem:[#allocation2 + $0x58] sm:$0xff]
    %v386 = vld [vmem:[#allocation2 + $0x60] sm:$0xff]
    %v387 = vld [vmem:[#allocation2 + $0x68] sm:$0xff]
    %v388 = vld [vmem:[#allocation2 + $0x70] sm:$0xff]
    %v389 = vld [vmem:[#allocation2 + $0x78] sm:$0xff]
    %v390 = vmul.f32 %v374, %v134
    %v391 = vmul.f32 %v375, %v135
    %v392 = vmul.f32 %v376, %v136
    %v393 = vmul.f32 %v377, %v137
    %v394 = vmul.f32 %v378, %v138
    %v395 = vmul.f32 %v379, %v139
    %v396 = vmul.f32 %v380, %v140
    %v397 = vmul.f32 %v381, %v141
    %v398 = vmul.f32 %v382, %v142
    %v399 = vmul.f32 %v383, %v143
    %v400 = vmul.f32 %v384, %v144
    %v401 = vmul.f32 %v385, %v145
    %v402 = vmul.f32 %v386, %v146
    %v403 = vmul.f32 %v387, %v147
    %v404 = vmul.f32 %v388, %v148
    %v405 = vmul.f32 %v389, %v149
    %v406 = vpack.c.bf16 %v392, %v390
    %v407 = vpack.c.bf16 %v393, %v391
    %v408 = vpack.c.bf16 %v396, %v394
    %v409 = vpack.c.bf16 %v397, %v395
    %v410 = vpack.c.bf16 %v400, %v398
    %v411 = vpack.c.bf16 %v401, %v399
    %v412 = vpack.c.bf16 %v404, %v402
    %v413 = vpack.c.bf16 %v405, %v403
    %v414 = vld [vmem:[%s2] sm:$0xf]
    %v415 = vld [vmem:[%s2 + $0x4] sm:$0xf]
    %v416 = vld [vmem:[%s2 + $0x8] sm:$0xf]
    %v417 = vld [vmem:[%s2 + $0xc] sm:$0xf]
    %v418 = vld [vmem:[%s2 + $0x10] sm:$0xf]
    %v419 = vld [vmem:[%s2 + $0x14] sm:$0xf]
    %v420 = vld [vmem:[%s2 + $0x18] sm:$0xf]
    %v421 = vld [vmem:[%s2 + $0x1c] sm:$0xf]
    %v422 = vld [vmem:[%s2 + $0x20] sm:$0xf]
    %v423 = vld [vmem:[%s2 + $0x24] sm:$0xf]
    %v424 = vld [vmem:[%s2 + $0x28] sm:$0xf]
    %v425 = vld [vmem:[%s2 + $0x2c] sm:$0xf]
    %v426 = vld [vmem:[%s2 + $0x30] sm:$0xf]
    %v427 = vld [vmem:[%s2 + $0x34] sm:$0xf]
    %v428 = vld [vmem:[%s2 + $0x38] sm:$0xf]
    %v429 = vld [vmem:[%s2 + $0x3c] sm:$0xf]
    %v430 = vld [vmem:[%s2 + $0x40] sm:$0xf]
    %v431 = vld [vmem:[%s2 + $0x44] sm:$0xf]
    %v432 = vld [vmem:[%s2 + $0x48] sm:$0xf]
    %v433 = vld [vmem:[%s2 + $0x4c] sm:$0xf]
    %v454 = vunpack.c.l.b16 %v414
    %v455 = vunpack.c.l.b16 %v415
    %v456 = vunpack.c.l.b16 %v416
    %v457 = vunpack.c.l.b16 %v417
    %v458 = vunpack.c.l.b16 %v418
    %v459 = vunpack.c.l.b16 %v419
    %v460 = vunpack.c.l.b16 %v420
    %v461 = vunpack.c.l.b16 %v421
    %v462 = vunpack.c.l.b16 %v422
    %v463 = vunpack.c.l.b16 %v423
    %v464 = vunpack.c.l.b16 %v424
    %v465 = vunpack.c.l.b16 %v425
    %v466 = vunpack.c.l.b16 %v426
    %v467 = vunpack.c.l.b16 %v427
    %v468 = vunpack.c.l.b16 %v428
    %v469 = vunpack.c.l.b16 %v429
    %v470 = vunpack.c.l.b16 %v430
    %v471 = vunpack.c.l.b16 %v431
    %v472 = vunpack.c.l.b16 %v432
    %v473 = vunpack.c.l.b16 %v433
    %v474 = vpack.c.b16 %v455, %v454
    %v475 = vpack.c.b16 %v457, %v456
    %v476 = vpack.c.b16 %v459, %v458
    %v477 = vpack.c.b16 %v461, %v460
    %v478 = vpack.c.b16 %v463, %v462
    %v479 = vpack.c.b16 %v465, %v464
    %v480 = vpack.c.b16 %v467, %v466
    %v481 = vpack.c.b16 %v469, %v468
    %v482 = vpack.c.b16 %v471, %v470
    %v483 = vpack.c.b16 %v473, %v472
    %v495 = vsel %vm29, %v407, 0
    %v498 = vsel %vm29, %v409, 0
    %v501 = vsel %vm29, %v411, 0
    %v504 = vsel %vm29, %v413, 0
    %506 = vmatpush.bf16.msra.mxu0 %v481
    %507 = vmatpush.bf16.msra.mxu0 %v480
    %508 = vmatpush.bf16.msra.mxu0 %v479
    %509 = vmatpush.bf16.msra.mxu0 %v478
    %510 = vmatpush.bf16.msra.mxu0 %v477
    %511 = vmatpush.bf16.msra.mxu0 %v476
    %512 = vmatpush.bf16.msra.mxu0 %v475
    %513 = vmatpush.bf16.msra.mxu0 %v474
    %514 = vmatmul.bf16.gmra.mxu0 %v406
    %v515 = vpop.f32.mrf.mxu0
    %v516 = vadd.f32 0.0, %v515
    %v517 = vpop.f32.mrf.mxu0
    %v518 = vadd.f32 0.0, %v517
    %519 = vmatmul.bf16.gmra.mxu0 %v408
    %v520 = vpop.f32.mrf.mxu0
    %v521 = vadd.f32 0.0, %v520
    %v522 = vpop.f32.mrf.mxu0
    %v523 = vadd.f32 0.0, %v522
    %524 = vmatmul.bf16.gmra.mxu0 %v410
    %v525 = vpop.f32.mrf.mxu0
    %v526 = vadd.f32 0.0, %v525
    %v527 = vpop.f32.mrf.mxu0
    %v528 = vadd.f32 0.0, %v527
    %529 = vmatmul.bf16.gmra.mxu0 %v412
    %v530 = vpop.f32.mrf.mxu0
    %v531 = vadd.f32 0.0, %v530
    %v532 = vpop.f32.mrf.mxu0
    %v533 = vadd.f32 0.0, %v532
    %534 = vdwg.mxu0
    %535 = vmatpush.bf16.msra.mxu0 0
    %536 = vmatpush.bf16.msra.mxu0 0
    %537 = vmatpush.bf16.msra.mxu0 0
    %538 = vmatpush.bf16.msra.mxu0 0
    %539 = vmatpush.bf16.msra.mxu0 0
    %540 = vmatpush.bf16.msra.mxu0 0
    %541 = vmatpush.bf16.msra.mxu0 %v483
    %542 = vmatpush.bf16.msra.mxu0 %v482
    %543 = vmatmul.bf16.gmra.mxu0 %v495
    %v544 = vpop.f32.mrf.mxu0
    %v545 = vadd.f32 %v516, %v544
    %v546 = vpop.f32.mrf.mxu0
    %v547 = vadd.f32 %v518, %v546
    %548 = vmatmul.bf16.gmra.mxu0 %v498
    %v549 = vpop.f32.mrf.mxu0
    %v550 = vadd.f32 %v521, %v549
    %v551 = vpop.f32.mrf.mxu0
    %v552 = vadd.f32 %v523, %v551
    %553 = vmatmul.bf16.gmra.mxu0 %v501
    %v554 = vpop.f32.mrf.mxu0
    %v555 = vadd.f32 %v526, %v554
    %v556 = vpop.f32.mrf.mxu0
    %v557 = vadd.f32 %v528, %v556
    %558 = vmatmul.bf16.gmra.mxu0 %v504
    %v559 = vpop.f32.mrf.mxu0
    %v560 = vadd.f32 %v531, %v559
    %v561 = vpop.f32.mrf.mxu0
    %v562 = vadd.f32 %v533, %v561
    %563 = vdwg.mxu0
    %v564 = vperm.slane %v373, 0
    %v565 = vadd.f32 %v564, %v545
    %v566 = vadd.f32 %v564, %v547
    %v567 = vadd.f32 %v564, %v550
    %v568 = vadd.f32 %v564, %v552
    %v569 = vadd.f32 %v564, %v555
    %v570 = vadd.f32 %v564, %v557
    %v571 = vadd.f32 %v564, %v560
    %v572 = vadd.f32 %v564, %v562
    %v573 = vld [vmem:[#allocation2 + $0x10] sm:$0xff]
    %v574 = vld [vmem:[#allocation2 + $0x18] sm:$0xff]
    %v575 = vld [vmem:[#allocation2 + $0x20] sm:$0xff]
    %v576 = vld [vmem:[#allocation2 + $0x28] sm:$0xff]
    %v577 = vld [vmem:[#allocation2 + $0x30] sm:$0xff]
    %v578 = vld [vmem:[#allocation2 + $0x38] sm:$0xff]
    %v579 = vld [vmem:[#allocation2 + $0x40] sm:$0xff]
    %v580 = vld [vmem:[#allocation2 + $0x48] sm:$0xff]
    %v581 = vld [vmem:[#allocation2 + $0x50] sm:$0xff]
    %v582 = vld [vmem:[#allocation2 + $0x58] sm:$0xff]
    %v583 = vld [vmem:[#allocation2 + $0x60] sm:$0xff]
    %v584 = vld [vmem:[#allocation2 + $0x68] sm:$0xff]
    %v585 = vld [vmem:[#allocation2 + $0x70] sm:$0xff]
    %v586 = vld [vmem:[#allocation2 + $0x78] sm:$0xff]
    %v587 = vld [vmem:[#allocation2 + $0x80] sm:$0xff]
    %v588 = vld [vmem:[#allocation2 + $0x88] sm:$0xff]
    %v589 = vmul.f32 %v573, %v134
    %v590 = vmul.f32 %v574, %v135
    %v591 = vmul.f32 %v575, %v136
    %v592 = vmul.f32 %v576, %v137
    %v593 = vmul.f32 %v577, %v138
    %v594 = vmul.f32 %v578, %v139
    %v595 = vmul.f32 %v579, %v140
    %v596 = vmul.f32 %v580, %v141
    %v597 = vmul.f32 %v581, %v142
    %v598 = vmul.f32 %v582, %v143
    %v599 = vmul.f32 %v583, %v144
    %v600 = vmul.f32 %v584, %v145
    %v601 = vmul.f32 %v585, %v146
    %v602 = vmul.f32 %v586, %v147
    %v603 = vmul.f32 %v587, %v148
    %v604 = vmul.f32 %v588, %v149
    %v605 = vpack.c.bf16 %v591, %v589
    %v606 = vpack.c.bf16 %v592, %v590
    %v607 = vpack.c.bf16 %v595, %v593
    %v608 = vpack.c.bf16 %v596, %v594
    %v609 = vpack.c.bf16 %v599, %v597
    %v610 = vpack.c.bf16 %v600, %v598
    %v611 = vpack.c.bf16 %v603, %v601
    %v612 = vpack.c.bf16 %v604, %v602
    %s613 = scalar_lea.vmem %s2, 80
    %v614 = vld [vmem:[%s613] sm:$0xf]
    %v615 = vld [vmem:[%s613 + $0x4] sm:$0xf]
    %v616 = vld [vmem:[%s613 + $0x8] sm:$0xf]
    %v617 = vld [vmem:[%s613 + $0xc] sm:$0xf]
    %v618 = vld [vmem:[%s613 + $0x10] sm:$0xf]
    %v619 = vld [vmem:[%s613 + $0x14] sm:$0xf]
    %v620 = vld [vmem:[%s613 + $0x18] sm:$0xf]
    %v621 = vld [vmem:[%s613 + $0x1c] sm:$0xf]
    %v622 = vld [vmem:[%s613 + $0x20] sm:$0xf]
    %v623 = vld [vmem:[%s613 + $0x24] sm:$0xf]
    %v624 = vld [vmem:[%s613 + $0x28] sm:$0xf]
    %v625 = vld [vmem:[%s613 + $0x2c] sm:$0xf]
    %v626 = vld [vmem:[%s613 + $0x30] sm:$0xf]
    %v627 = vld [vmem:[%s613 + $0x34] sm:$0xf]
    %v628 = vld [vmem:[%s613 + $0x38] sm:$0xf]
    %v629 = vld [vmem:[%s613 + $0x3c] sm:$0xf]
    %v630 = vld [vmem:[%s613 + $0x40] sm:$0xf]
    %v631 = vld [vmem:[%s613 + $0x44] sm:$0xf]
    %v632 = vld [vmem:[%s613 + $0x48] sm:$0xf]
    %v633 = vld [vmem:[%s613 + $0x4c] sm:$0xf]
    %v654 = vunpack.c.l.b16 %v614
    %v655 = vunpack.c.l.b16 %v615
    %v656 = vunpack.c.l.b16 %v616
    %v657 = vunpack.c.l.b16 %v617
    %v658 = vunpack.c.l.b16 %v618
    %v659 = vunpack.c.l.b16 %v619
    %v660 = vunpack.c.l.b16 %v620
    %v661 = vunpack.c.l.b16 %v621
    %v662 = vunpack.c.l.b16 %v622
    %v663 = vunpack.c.l.b16 %v623
    %v664 = vunpack.c.l.b16 %v624
    %v665 = vunpack.c.l.b16 %v625
    %v666 = vunpack.c.l.b16 %v626
    %v667 = vunpack.c.l.b16 %v627
    %v668 = vunpack.c.l.b16 %v628
    %v669 = vunpack.c.l.b16 %v629
    %v670 = vunpack.c.l.b16 %v630
    %v671 = vunpack.c.l.b16 %v631
    %v672 = vunpack.c.l.b16 %v632
    %v673 = vunpack.c.l.b16 %v633
    %v674 = vpack.c.b16 %v655, %v654
    %v675 = vpack.c.b16 %v657, %v656
    %v676 = vpack.c.b16 %v659, %v658
    %v677 = vpack.c.b16 %v661, %v660
    %v678 = vpack.c.b16 %v663, %v662
    %v679 = vpack.c.b16 %v665, %v664
    %v680 = vpack.c.b16 %v667, %v666
    %v681 = vpack.c.b16 %v669, %v668
    %v682 = vpack.c.b16 %v671, %v670
    %v683 = vpack.c.b16 %v673, %v672
    %v695 = vsel %vm29, %v606, 0
    %v698 = vsel %vm29, %v608, 0
    %v701 = vsel %vm29, %v610, 0
    %v704 = vsel %vm29, %v612, 0
    %706 = vmatpush.bf16.msra.mxu0 %v681
    %707 = vmatpush.bf16.msra.mxu0 %v680
    %708 = vmatpush.bf16.msra.mxu0 %v679
    %709 = vmatpush.bf16.msra.mxu0 %v678
    %710 = vmatpush.bf16.msra.mxu0 %v677
    %711 = vmatpush.bf16.msra.mxu0 %v676
    %712 = vmatpush.bf16.msra.mxu0 %v675
    %713 = vmatpush.bf16.msra.mxu0 %v674
    %714 = vmatmul.bf16.gmra.mxu0 %v605
    %v715 = vpop.f32.mrf.mxu0
    %v716 = vadd.f32 0.0, %v715
    %v717 = vpop.f32.mrf.mxu0
    %v718 = vadd.f32 0.0, %v717
    %719 = vmatmul.bf16.gmra.mxu0 %v607
    %v720 = vpop.f32.mrf.mxu0
    %v721 = vadd.f32 0.0, %v720
    %v722 = vpop.f32.mrf.mxu0
    %v723 = vadd.f32 0.0, %v722
    %724 = vmatmul.bf16.gmra.mxu0 %v609
    %v725 = vpop.f32.mrf.mxu0
    %v726 = vadd.f32 0.0, %v725
    %v727 = vpop.f32.mrf.mxu0
    %v728 = vadd.f32 0.0, %v727
    %729 = vmatmul.bf16.gmra.mxu0 %v611
    %v730 = vpop.f32.mrf.mxu0
    %v731 = vadd.f32 0.0, %v730
    %v732 = vpop.f32.mrf.mxu0
    %v733 = vadd.f32 0.0, %v732
    %734 = vdwg.mxu0
    %735 = vmatpush.bf16.msra.mxu0 0
    %736 = vmatpush.bf16.msra.mxu0 0
    %737 = vmatpush.bf16.msra.mxu0 0
    %738 = vmatpush.bf16.msra.mxu0 0
    %739 = vmatpush.bf16.msra.mxu0 0
    %740 = vmatpush.bf16.msra.mxu0 0
    %741 = vmatpush.bf16.msra.mxu0 %v683
    %742 = vmatpush.bf16.msra.mxu0 %v682
    %743 = vmatmul.bf16.gmra.mxu0 %v695
    %v744 = vpop.f32.mrf.mxu0
    %v745 = vadd.f32 %v716, %v744
    %v746 = vpop.f32.mrf.mxu0
    %v747 = vadd.f32 %v718, %v746
    %748 = vmatmul.bf16.gmra.mxu0 %v698
    %v749 = vpop.f32.mrf.mxu0
    %v750 = vadd.f32 %v721, %v749
    %v751 = vpop.f32.mrf.mxu0
    %v752 = vadd.f32 %v723, %v751
    %753 = vmatmul.bf16.gmra.mxu0 %v701
    %v754 = vpop.f32.mrf.mxu0
    %v755 = vadd.f32 %v726, %v754
    %v756 = vpop.f32.mrf.mxu0
    %v757 = vadd.f32 %v728, %v756
    %758 = vmatmul.bf16.gmra.mxu0 %v704
    %v759 = vpop.f32.mrf.mxu0
    %v760 = vadd.f32 %v731, %v759
    %v761 = vpop.f32.mrf.mxu0
    %v762 = vadd.f32 %v733, %v761
    %763 = vdwg.mxu0
    %v764 = vadd.f32 %v565, %v745
    %v765 = vadd.f32 %v566, %v747
    %v766 = vadd.f32 %v567, %v750
    %v767 = vadd.f32 %v568, %v752
    %v768 = vadd.f32 %v569, %v755
    %v769 = vadd.f32 %v570, %v757
    %v770 = vadd.f32 %v571, %v760
    %v771 = vadd.f32 %v572, %v762
    %v772 = vld [vmem:[#allocation2 + $0x20] sm:$0xff]
    %v773 = vld [vmem:[#allocation2 + $0x28] sm:$0xff]
    %v774 = vld [vmem:[#allocation2 + $0x30] sm:$0xff]
    %v775 = vld [vmem:[#allocation2 + $0x38] sm:$0xff]
    %v776 = vld [vmem:[#allocation2 + $0x40] sm:$0xff]
    %v777 = vld [vmem:[#allocation2 + $0x48] sm:$0xff]
    %v778 = vld [vmem:[#allocation2 + $0x50] sm:$0xff]
    %v779 = vld [vmem:[#allocation2 + $0x58] sm:$0xff]
    %v780 = vld [vmem:[#allocation2 + $0x60] sm:$0xff]
    %v781 = vld [vmem:[#allocation2 + $0x68] sm:$0xff]
    %v782 = vld [vmem:[#allocation2 + $0x70] sm:$0xff]
    %v783 = vld [vmem:[#allocation2 + $0x78] sm:$0xff]
    %v784 = vld [vmem:[#allocation2 + $0x80] sm:$0xff]
    %v785 = vld [vmem:[#allocation2 + $0x88] sm:$0xff]
    %v786 = vld [vmem:[#allocation2 + $0x90] sm:$0xff]
    %v787 = vld [vmem:[#allocation2 + $0x98] sm:$0xff]
    %v788 = vmul.f32 %v772, %v134
    %v789 = vmul.f32 %v773, %v135
    %v790 = vmul.f32 %v774, %v136
    %v791 = vmul.f32 %v775, %v137
    %v792 = vmul.f32 %v776, %v138
    %v793 = vmul.f32 %v777, %v139
    %v794 = vmul.f32 %v778, %v140
    %v795 = vmul.f32 %v779, %v141
    %v796 = vmul.f32 %v780, %v142
    %v797 = vmul.f32 %v781, %v143
    %v798 = vmul.f32 %v782, %v144
    %v799 = vmul.f32 %v783, %v145
    %v800 = vmul.f32 %v784, %v146
    %v801 = vmul.f32 %v785, %v147
    %v802 = vmul.f32 %v786, %v148
    %v803 = vmul.f32 %v787, %v149
    %v804 = vpack.c.bf16 %v790, %v788
    %v805 = vpack.c.bf16 %v791, %v789
    %v806 = vpack.c.bf16 %v794, %v792
    %v807 = vpack.c.bf16 %v795, %v793
    %v808 = vpack.c.bf16 %v798, %v796
    %v809 = vpack.c.bf16 %v799, %v797
    %v810 = vpack.c.bf16 %v802, %v800
    %v811 = vpack.c.bf16 %v803, %v801
    %s812 = scalar_lea.vmem %s2, 160
    %v813 = vld [vmem:[%s812] sm:$0xf]
    %v814 = vld [vmem:[%s812 + $0x4] sm:$0xf]
    %v815 = vld [vmem:[%s812 + $0x8] sm:$0xf]
    %v816 = vld [vmem:[%s812 + $0xc] sm:$0xf]
    %v817 = vld [vmem:[%s812 + $0x10] sm:$0xf]
    %v818 = vld [vmem:[%s812 + $0x14] sm:$0xf]
    %v819 = vld [vmem:[%s812 + $0x18] sm:$0xf]
    %v820 = vld [vmem:[%s812 + $0x1c] sm:$0xf]
    %v821 = vld [vmem:[%s812 + $0x20] sm:$0xf]
    %v822 = vld [vmem:[%s812 + $0x24] sm:$0xf]
    %v823 = vld [vmem:[%s812 + $0x28] sm:$0xf]
    %v824 = vld [vmem:[%s812 + $0x2c] sm:$0xf]
    %v825 = vld [vmem:[%s812 + $0x30] sm:$0xf]
    %v826 = vld [vmem:[%s812 + $0x34] sm:$0xf]
    %v827 = vld [vmem:[%s812 + $0x38] sm:$0xf]
    %v828 = vld [vmem:[%s812 + $0x3c] sm:$0xf]
    %v829 = vld [vmem:[%s812 + $0x40] sm:$0xf]
    %v830 = vld [vmem:[%s812 + $0x44] sm:$0xf]
    %v831 = vld [vmem:[%s812 + $0x48] sm:$0xf]
    %v832 = vld [vmem:[%s812 + $0x4c] sm:$0xf]
    %v853 = vunpack.c.l.b16 %v813
    %v854 = vunpack.c.l.b16 %v814
    %v855 = vunpack.c.l.b16 %v815
    %v856 = vunpack.c.l.b16 %v816
    %v857 = vunpack.c.l.b16 %v817
    %v858 = vunpack.c.l.b16 %v818
    %v859 = vunpack.c.l.b16 %v819
    %v860 = vunpack.c.l.b16 %v820
    %v861 = vunpack.c.l.b16 %v821
    %v862 = vunpack.c.l.b16 %v822
    %v863 = vunpack.c.l.b16 %v823
    %v864 = vunpack.c.l.b16 %v824
    %v865 = vunpack.c.l.b16 %v825
    %v866 = vunpack.c.l.b16 %v826
    %v867 = vunpack.c.l.b16 %v827
    %v868 = vunpack.c.l.b16 %v828
    %v869 = vunpack.c.l.b16 %v829
    %v870 = vunpack.c.l.b16 %v830
    %v871 = vunpack.c.l.b16 %v831
    %v872 = vunpack.c.l.b16 %v832
    %v873 = vpack.c.b16 %v854, %v853
    %v874 = vpack.c.b16 %v856, %v855
    %v875 = vpack.c.b16 %v858, %v857
    %v876 = vpack.c.b16 %v860, %v859
    %v877 = vpack.c.b16 %v862, %v861
    %v878 = vpack.c.b16 %v864, %v863
    %v879 = vpack.c.b16 %v866, %v865
    %v880 = vpack.c.b16 %v868, %v867
    %v881 = vpack.c.b16 %v870, %v869
    %v882 = vpack.c.b16 %v872, %v871
    %v894 = vsel %vm29, %v805, 0
    %v897 = vsel %vm29, %v807, 0
    %v900 = vsel %vm29, %v809, 0
    %v903 = vsel %vm29, %v811, 0
    %905 = vmatpush.bf16.msra.mxu0 %v880
    %906 = vmatpush.bf16.msra.mxu0 %v879
    %907 = vmatpush.bf16.msra.mxu0 %v878
    %908 = vmatpush.bf16.msra.mxu0 %v877
    %909 = vmatpush.bf16.msra.mxu0 %v876
    %910 = vmatpush.bf16.msra.mxu0 %v875
    %911 = vmatpush.bf16.msra.mxu0 %v874
    %912 = vmatpush.bf16.msra.mxu0 %v873
    %913 = vmatmul.bf16.gmra.mxu0 %v804
    %v914 = vpop.f32.mrf.mxu0
    %v915 = vadd.f32 0.0, %v914
    %v916 = vpop.f32.mrf.mxu0
    %v917 = vadd.f32 0.0, %v916
    %918 = vmatmul.bf16.gmra.mxu0 %v806
    %v919 = vpop.f32.mrf.mxu0
    %v920 = vadd.f32 0.0, %v919
    %v921 = vpop.f32.mrf.mxu0
    %v922 = vadd.f32 0.0, %v921
    %923 = vmatmul.bf16.gmra.mxu0 %v808
    %v924 = vpop.f32.mrf.mxu0
    %v925 = vadd.f32 0.0, %v924
    %v926 = vpop.f32.mrf.mxu0
    %v927 = vadd.f32 0.0, %v926
    %928 = vmatmul.bf16.gmra.mxu0 %v810
    %v929 = vpop.f32.mrf.mxu0
    %v930 = vadd.f32 0.0, %v929
    %v931 = vpop.f32.mrf.mxu0
    %v932 = vadd.f32 0.0, %v931
    %933 = vdwg.mxu0
    %934 = vmatpush.bf16.msra.mxu0 0
    %935 = vmatpush.bf16.msra.mxu0 0
    %936 = vmatpush.bf16.msra.mxu0 0
    %937 = vmatpush.bf16.msra.mxu0 0
    %938 = vmatpush.bf16.msra.mxu0 0
    %939 = vmatpush.bf16.msra.mxu0 0
    %940 = vmatpush.bf16.msra.mxu0 %v882
    %941 = vmatpush.bf16.msra.mxu0 %v881
    %942 = vmatmul.bf16.gmra.mxu0 %v894
    %v943 = vpop.f32.mrf.mxu0
    %v944 = vadd.f32 %v915, %v943
    %v945 = vpop.f32.mrf.mxu0
    %v946 = vadd.f32 %v917, %v945
    %947 = vmatmul.bf16.gmra.mxu0 %v897
    %v948 = vpop.f32.mrf.mxu0
    %v949 = vadd.f32 %v920, %v948
    %v950 = vpop.f32.mrf.mxu0
    %v951 = vadd.f32 %v922, %v950
    %952 = vmatmul.bf16.gmra.mxu0 %v900
    %v953 = vpop.f32.mrf.mxu0
    %v954 = vadd.f32 %v925, %v953
    %v955 = vpop.f32.mrf.mxu0
    %v956 = vadd.f32 %v927, %v955
    %957 = vmatmul.bf16.gmra.mxu0 %v903
    %v958 = vpop.f32.mrf.mxu0
    %v959 = vadd.f32 %v930, %v958
    %v960 = vpop.f32.mrf.mxu0
    %v961 = vadd.f32 %v932, %v960
    %962 = vdwg.mxu0
    %v963 = vadd.f32 %v764, %v944
    %v964 = vadd.f32 %v765, %v946
    %v965 = vadd.f32 %v766, %v949
    %v966 = vadd.f32 %v767, %v951
    %v967 = vadd.f32 %v768, %v954
    %v968 = vadd.f32 %v769, %v956
    %v969 = vadd.f32 %v770, %v959
    %v970 = vadd.f32 %v771, %v961
    %v971 = vld [vmem:[#allocation2 + $0x30] sm:$0xff]
    %v972 = vld [vmem:[#allocation2 + $0x38] sm:$0xff]
    %v973 = vld [vmem:[#allocation2 + $0x40] sm:$0xff]
    %v974 = vld [vmem:[#allocation2 + $0x48] sm:$0xff]
    %v975 = vld [vmem:[#allocation2 + $0x50] sm:$0xff]
    %v976 = vld [vmem:[#allocation2 + $0x58] sm:$0xff]
    %v977 = vld [vmem:[#allocation2 + $0x60] sm:$0xff]
    %v978 = vld [vmem:[#allocation2 + $0x68] sm:$0xff]
    %v979 = vld [vmem:[#allocation2 + $0x70] sm:$0xff]
    %v980 = vld [vmem:[#allocation2 + $0x78] sm:$0xff]
    %v981 = vld [vmem:[#allocation2 + $0x80] sm:$0xff]
    %v982 = vld [vmem:[#allocation2 + $0x88] sm:$0xff]
    %v983 = vld [vmem:[#allocation2 + $0x90] sm:$0xff]
    %v984 = vld [vmem:[#allocation2 + $0x98] sm:$0xff]
    %v985 = vld [vmem:[#allocation2 + $0xa0] sm:$0xff]
    %v986 = vld [vmem:[#allocation2 + $0xa8] sm:$0xff]
    %v987 = vmul.f32 %v971, %v134
    %v988 = vmul.f32 %v972, %v135
    %v989 = vmul.f32 %v973, %v136
    %v990 = vmul.f32 %v974, %v137
    %v991 = vmul.f32 %v975, %v138
    %v992 = vmul.f32 %v976, %v139
    %v993 = vmul.f32 %v977, %v140
    %v994 = vmul.f32 %v978, %v141
    %v995 = vmul.f32 %v979, %v142
    %v996 = vmul.f32 %v980, %v143
    %v997 = vmul.f32 %v981, %v144
    %v998 = vmul.f32 %v982, %v145
    %v999 = vmul.f32 %v983, %v146
    %v1000 = vmul.f32 %v984, %v147
    %v1001 = vmul.f32 %v985, %v148
    %v1002 = vmul.f32 %v986, %v149
    %v1003 = vpack.c.bf16 %v989, %v987
    %v1004 = vpack.c.bf16 %v990, %v988
    %v1005 = vpack.c.bf16 %v993, %v991
    %v1006 = vpack.c.bf16 %v994, %v992
    %v1007 = vpack.c.bf16 %v997, %v995
    %v1008 = vpack.c.bf16 %v998, %v996
    %v1009 = vpack.c.bf16 %v1001, %v999
    %v1010 = vpack.c.bf16 %v1002, %v1000
    %s1011 = scalar_lea.vmem %s2, 240
    %v1012 = vld [vmem:[%s1011] sm:$0xf]
    %v1013 = vld [vmem:[%s1011 + $0x4] sm:$0xf]
    %v1014 = vld [vmem:[%s1011 + $0x8] sm:$0xf]
    %v1015 = vld [vmem:[%s1011 + $0xc] sm:$0xf]
    %v1016 = vld [vmem:[%s1011 + $0x10] sm:$0xf]
    %v1017 = vld [vmem:[%s1011 + $0x14] sm:$0xf]
    %v1018 = vld [vmem:[%s1011 + $0x18] sm:$0xf]
    %v1019 = vld [vmem:[%s1011 + $0x1c] sm:$0xf]
    %v1020 = vld [vmem:[%s1011 + $0x20] sm:$0xf]
    %v1021 = vld [vmem:[%s1011 + $0x24] sm:$0xf]
    %v1022 = vld [vmem:[%s1011 + $0x28] sm:$0xf]
    %v1023 = vld [vmem:[%s1011 + $0x2c] sm:$0xf]
    %v1024 = vld [vmem:[%s1011 + $0x30] sm:$0xf]
    %v1025 = vld [vmem:[%s1011 + $0x34] sm:$0xf]
    %v1026 = vld [vmem:[%s1011 + $0x38] sm:$0xf]
    %v1027 = vld [vmem:[%s1011 + $0x3c] sm:$0xf]
    %v1028 = vld [vmem:[%s1011 + $0x40] sm:$0xf]
    %v1029 = vld [vmem:[%s1011 + $0x44] sm:$0xf]
    %v1030 = vld [vmem:[%s1011 + $0x48] sm:$0xf]
    %v1031 = vld [vmem:[%s1011 + $0x4c] sm:$0xf]
    %v1052 = vunpack.c.l.b16 %v1012
    %v1053 = vunpack.c.l.b16 %v1013
    %v1054 = vunpack.c.l.b16 %v1014
    %v1055 = vunpack.c.l.b16 %v1015
    %v1056 = vunpack.c.l.b16 %v1016
    %v1057 = vunpack.c.l.b16 %v1017
    %v1058 = vunpack.c.l.b16 %v1018
    %v1059 = vunpack.c.l.b16 %v1019
    %v1060 = vunpack.c.l.b16 %v1020
    %v1061 = vunpack.c.l.b16 %v1021
    %v1062 = vunpack.c.l.b16 %v1022
    %v1063 = vunpack.c.l.b16 %v1023
    %v1064 = vunpack.c.l.b16 %v1024
    %v1065 = vunpack.c.l.b16 %v1025
    %v1066 = vunpack.c.l.b16 %v1026
    %v1067 = vunpack.c.l.b16 %v1027
    %v1068 = vunpack.c.l.b16 %v1028
    %v1069 = vunpack.c.l.b16 %v1029
    %v1070 = vunpack.c.l.b16 %v1030
    %v1071 = vunpack.c.l.b16 %v1031
    %v1072 = vpack.c.b16 %v1053, %v1052
    %v1073 = vpack.c.b16 %v1055, %v1054
    %v1074 = vpack.c.b16 %v1057, %v1056
    %v1075 = vpack.c.b16 %v1059, %v1058
    %v1076 = vpack.c.b16 %v1061, %v1060
    %v1077 = vpack.c.b16 %v1063, %v1062
    %v1078 = vpack.c.b16 %v1065, %v1064
    %v1079 = vpack.c.b16 %v1067, %v1066
    %v1080 = vpack.c.b16 %v1069, %v1068
    %v1081 = vpack.c.b16 %v1071, %v1070
    %v1093 = vsel %vm29, %v1004, 0
    %v1096 = vsel %vm29, %v1006, 0
    %v1099 = vsel %vm29, %v1008, 0
    %v1102 = vsel %vm29, %v1010, 0
    %1104 = vmatpush.bf16.msra.mxu0 %v1079
    %1105 = vmatpush.bf16.msra.mxu0 %v1078
    %1106 = vmatpush.bf16.msra.mxu0 %v1077
    %1107 = vmatpush.bf16.msra.mxu0 %v1076
    %1108 = vmatpush.bf16.msra.mxu0 %v1075
    %1109 = vmatpush.bf16.msra.mxu0 %v1074
    %1110 = vmatpush.bf16.msra.mxu0 %v1073
    %1111 = vmatpush.bf16.msra.mxu0 %v1072
    %1112 = vmatmul.bf16.gmra.mxu0 %v1003
    %v1113 = vpop.f32.mrf.mxu0
    %v1114 = vadd.f32 0.0, %v1113
    %v1115 = vpop.f32.mrf.mxu0
    %v1116 = vadd.f32 0.0, %v1115
    %1117 = vmatmul.bf16.gmra.mxu0 %v1005
    %v1118 = vpop.f32.mrf.mxu0
    %v1119 = vadd.f32 0.0, %v1118
    %v1120 = vpop.f32.mrf.mxu0
    %v1121 = vadd.f32 0.0, %v1120
    %1122 = vmatmul.bf16.gmra.mxu0 %v1007
    %v1123 = vpop.f32.mrf.mxu0
    %v1124 = vadd.f32 0.0, %v1123
    %v1125 = vpop.f32.mrf.mxu0
    %v1126 = vadd.f32 0.0, %v1125
    %1127 = vmatmul.bf16.gmra.mxu0 %v1009
    %v1128 = vpop.f32.mrf.mxu0
    %v1129 = vadd.f32 0.0, %v1128
    %v1130 = vpop.f32.mrf.mxu0
    %v1131 = vadd.f32 0.0, %v1130
    %1132 = vdwg.mxu0
    %1133 = vmatpush.bf16.msra.mxu0 0
    %1134 = vmatpush.bf16.msra.mxu0 0
    %1135 = vmatpush.bf16.msra.mxu0 0
    %1136 = vmatpush.bf16.msra.mxu0 0
    %1137 = vmatpush.bf16.msra.mxu0 0
    %1138 = vmatpush.bf16.msra.mxu0 0
    %1139 = vmatpush.bf16.msra.mxu0 %v1081
    %1140 = vmatpush.bf16.msra.mxu0 %v1080
    %1141 = vmatmul.bf16.gmra.mxu0 %v1093
    %v1142 = vpop.f32.mrf.mxu0
    %v1143 = vadd.f32 %v1114, %v1142
    %v1144 = vpop.f32.mrf.mxu0
    %v1145 = vadd.f32 %v1116, %v1144
    %1146 = vmatmul.bf16.gmra.mxu0 %v1096
    %v1147 = vpop.f32.mrf.mxu0
    %v1148 = vadd.f32 %v1119, %v1147
    %v1149 = vpop.f32.mrf.mxu0
    %v1150 = vadd.f32 %v1121, %v1149
    %1151 = vmatmul.bf16.gmra.mxu0 %v1099
    %v1152 = vpop.f32.mrf.mxu0
    %v1153 = vadd.f32 %v1124, %v1152
    %v1154 = vpop.f32.mrf.mxu0
    %v1155 = vadd.f32 %v1126, %v1154
    %1156 = vmatmul.bf16.gmra.mxu0 %v1102
    %v1157 = vpop.f32.mrf.mxu0
    %v1158 = vadd.f32 %v1129, %v1157
    %v1159 = vpop.f32.mrf.mxu0
    %v1160 = vadd.f32 %v1131, %v1159
    %1161 = vdwg.mxu0
    %v1162 = vadd.f32 %v963, %v1143
    %v1163 = vadd.f32 %v964, %v1145
    %v1164 = vadd.f32 %v965, %v1148
    %v1165 = vadd.f32 %v966, %v1150
    %v1166 = vadd.f32 %v967, %v1153
    %v1167 = vadd.f32 %v968, %v1155
    %v1168 = vadd.f32 %v969, %v1158
    %v1169 = vadd.f32 %v970, %v1160
    %v1170 = vld [vmem:[#allocation2 + $0x40] sm:$0xff]
    %v1171 = vld [vmem:[#allocation2 + $0x48] sm:$0xff]
    %v1172 = vld [vmem:[#allocation2 + $0x50] sm:$0xff]
    %v1173 = vld [vmem:[#allocation2 + $0x58] sm:$0xff]
    %v1174 = vld [vmem:[#allocation2 + $0x60] sm:$0xff]
    %v1175 = vld [vmem:[#allocation2 + $0x68] sm:$0xff]
    %v1176 = vld [vmem:[#allocation2 + $0x70] sm:$0xff]
    %v1177 = vld [vmem:[#allocation2 + $0x78] sm:$0xff]
    %v1178 = vld [vmem:[#allocation2 + $0x80] sm:$0xff]
    %v1179 = vld [vmem:[#allocation2 + $0x88] sm:$0xff]
    %v1180 = vld [vmem:[#allocation2 + $0x90] sm:$0xff]
    %v1181 = vld [vmem:[#allocation2 + $0x98] sm:$0xff]
    %v1182 = vld [vmem:[#allocation2 + $0xa0] sm:$0xff]
    %v1183 = vld [vmem:[#allocation2 + $0xa8] sm:$0xff]
    %v1184 = vld [vmem:[#allocation2 + $0xb0] sm:$0xff]
    %v1185 = vld [vmem:[#allocation2 + $0xb8] sm:$0xff]
    %v1186 = vmul.f32 %v1170, %v134
    %v1187 = vmul.f32 %v1171, %v135
    %v1188 = vmul.f32 %v1172, %v136
    %v1189 = vmul.f32 %v1173, %v137
    %v1190 = vmul.f32 %v1174, %v138
    %v1191 = vmul.f32 %v1175, %v139
    %v1192 = vmul.f32 %v1176, %v140
    %v1193 = vmul.f32 %v1177, %v141
    %v1194 = vmul.f32 %v1178, %v142
    %v1195 = vmul.f32 %v1179, %v143
    %v1196 = vmul.f32 %v1180, %v144
    %v1197 = vmul.f32 %v1181, %v145
    %v1198 = vmul.f32 %v1182, %v146
    %v1199 = vmul.f32 %v1183, %v147
    %v1200 = vmul.f32 %v1184, %v148
    %v1201 = vmul.f32 %v1185, %v149
    %v1202 = vpack.c.bf16 %v1188, %v1186
    %v1203 = vpack.c.bf16 %v1189, %v1187
    %v1204 = vpack.c.bf16 %v1192, %v1190
    %v1205 = vpack.c.bf16 %v1193, %v1191
    %v1206 = vpack.c.bf16 %v1196, %v1194
    %v1207 = vpack.c.bf16 %v1197, %v1195
    %v1208 = vpack.c.bf16 %v1200, %v1198
    %v1209 = vpack.c.bf16 %v1201, %v1199
    %s1210 = scalar_lea.vmem %s2, 320
    %v1211 = vld [vmem:[%s1210] sm:$0xf]
    %v1212 = vld [vmem:[%s1210 + $0x4] sm:$0xf]
    %v1213 = vld [vmem:[%s1210 + $0x8] sm:$0xf]
    %v1214 = vld [vmem:[%s1210 + $0xc] sm:$0xf]
    %v1215 = vld [vmem:[%s1210 + $0x10] sm:$0xf]
    %v1216 = vld [vmem:[%s1210 + $0x14] sm:$0xf]
    %v1217 = vld [vmem:[%s1210 + $0x18] sm:$0xf]
    %v1218 = vld [vmem:[%s1210 + $0x1c] sm:$0xf]
    %v1219 = vld [vmem:[%s1210 + $0x20] sm:$0xf]
    %v1220 = vld [vmem:[%s1210 + $0x24] sm:$0xf]
    %v1221 = vld [vmem:[%s1210 + $0x28] sm:$0xf]
    %v1222 = vld [vmem:[%s1210 + $0x2c] sm:$0xf]
    %v1223 = vld [vmem:[%s1210 + $0x30] sm:$0xf]
    %v1224 = vld [vmem:[%s1210 + $0x34] sm:$0xf]
    %v1225 = vld [vmem:[%s1210 + $0x38] sm:$0xf]
    %v1226 = vld [vmem:[%s1210 + $0x3c] sm:$0xf]
    %v1227 = vld [vmem:[%s1210 + $0x40] sm:$0xf]
    %v1228 = vld [vmem:[%s1210 + $0x44] sm:$0xf]
    %v1229 = vld [vmem:[%s1210 + $0x48] sm:$0xf]
    %v1230 = vld [vmem:[%s1210 + $0x4c] sm:$0xf]
    %v1251 = vunpack.c.l.b16 %v1211
    %v1252 = vunpack.c.l.b16 %v1212
    %v1253 = vunpack.c.l.b16 %v1213
    %v1254 = vunpack.c.l.b16 %v1214
    %v1255 = vunpack.c.l.b16 %v1215
    %v1256 = vunpack.c.l.b16 %v1216
    %v1257 = vunpack.c.l.b16 %v1217
    %v1258 = vunpack.c.l.b16 %v1218
    %v1259 = vunpack.c.l.b16 %v1219
    %v1260 = vunpack.c.l.b16 %v1220
    %v1261 = vunpack.c.l.b16 %v1221
    %v1262 = vunpack.c.l.b16 %v1222
    %v1263 = vunpack.c.l.b16 %v1223
    %v1264 = vunpack.c.l.b16 %v1224
    %v1265 = vunpack.c.l.b16 %v1225
    %v1266 = vunpack.c.l.b16 %v1226
    %v1267 = vunpack.c.l.b16 %v1227
    %v1268 = vunpack.c.l.b16 %v1228
    %v1269 = vunpack.c.l.b16 %v1229
    %v1270 = vunpack.c.l.b16 %v1230
    %v1271 = vpack.c.b16 %v1252, %v1251
    %v1272 = vpack.c.b16 %v1254, %v1253
    %v1273 = vpack.c.b16 %v1256, %v1255
    %v1274 = vpack.c.b16 %v1258, %v1257
    %v1275 = vpack.c.b16 %v1260, %v1259
    %v1276 = vpack.c.b16 %v1262, %v1261
    %v1277 = vpack.c.b16 %v1264, %v1263
    %v1278 = vpack.c.b16 %v1266, %v1265
    %v1279 = vpack.c.b16 %v1268, %v1267
    %v1280 = vpack.c.b16 %v1270, %v1269
    %v1292 = vsel %vm29, %v1203, 0
    %v1295 = vsel %vm29, %v1205, 0
    %v1298 = vsel %vm29, %v1207, 0
    %v1301 = vsel %vm29, %v1209, 0
    %1303 = vmatpush.bf16.msra.mxu0 %v1278
    %1304 = vmatpush.bf16.msra.mxu0 %v1277
    %1305 = vmatpush.bf16.msra.mxu0 %v1276
    %1306 = vmatpush.bf16.msra.mxu0 %v1275
    %1307 = vmatpush.bf16.msra.mxu0 %v1274
    %1308 = vmatpush.bf16.msra.mxu0 %v1273
    %1309 = vmatpush.bf16.msra.mxu0 %v1272
    %1310 = vmatpush.bf16.msra.mxu0 %v1271
    %1311 = vmatmul.bf16.gmra.mxu0 %v1202
    %v1312 = vpop.f32.mrf.mxu0
    %v1313 = vadd.f32 0.0, %v1312
    %v1314 = vpop.f32.mrf.mxu0
    %v1315 = vadd.f32 0.0, %v1314
    %1316 = vmatmul.bf16.gmra.mxu0 %v1204
    %v1317 = vpop.f32.mrf.mxu0
    %v1318 = vadd.f32 0.0, %v1317
    %v1319 = vpop.f32.mrf.mxu0
    %v1320 = vadd.f32 0.0, %v1319
    %1321 = vmatmul.bf16.gmra.mxu0 %v1206
    %v1322 = vpop.f32.mrf.mxu0
    %v1323 = vadd.f32 0.0, %v1322
    %v1324 = vpop.f32.mrf.mxu0
    %v1325 = vadd.f32 0.0, %v1324
    %1326 = vmatmul.bf16.gmra.mxu0 %v1208
    %v1327 = vpop.f32.mrf.mxu0
    %v1328 = vadd.f32 0.0, %v1327
    %v1329 = vpop.f32.mrf.mxu0
    %v1330 = vadd.f32 0.0, %v1329
    %1331 = vdwg.mxu0
    %1332 = vmatpush.bf16.msra.mxu0 0
    %1333 = vmatpush.bf16.msra.mxu0 0
    %1334 = vmatpush.bf16.msra.mxu0 0
    %1335 = vmatpush.bf16.msra.mxu0 0
    %1336 = vmatpush.bf16.msra.mxu0 0
    %1337 = vmatpush.bf16.msra.mxu0 0
    %1338 = vmatpush.bf16.msra.mxu0 %v1280
    %1339 = vmatpush.bf16.msra.mxu0 %v1279
    %1340 = vmatmul.bf16.gmra.mxu0 %v1292
    %v1341 = vpop.f32.mrf.mxu0
    %v1342 = vadd.f32 %v1313, %v1341
    %v1343 = vpop.f32.mrf.mxu0
    %v1344 = vadd.f32 %v1315, %v1343
    %1345 = vmatmul.bf16.gmra.mxu0 %v1295
    %v1346 = vpop.f32.mrf.mxu0
    %v1347 = vadd.f32 %v1318, %v1346
    %v1348 = vpop.f32.mrf.mxu0
    %v1349 = vadd.f32 %v1320, %v1348
    %1350 = vmatmul.bf16.gmra.mxu0 %v1298
    %v1351 = vpop.f32.mrf.mxu0
    %v1352 = vadd.f32 %v1323, %v1351
    %v1353 = vpop.f32.mrf.mxu0
    %v1354 = vadd.f32 %v1325, %v1353
    %1355 = vmatmul.bf16.gmra.mxu0 %v1301
    %v1356 = vpop.f32.mrf.mxu0
    %v1357 = vadd.f32 %v1328, %v1356
    %v1358 = vpop.f32.mrf.mxu0
    %v1359 = vadd.f32 %v1330, %v1358
    %1360 = vdwg.mxu0
    %v1361 = vadd.f32 %v1162, %v1342
    %v1362 = vadd.f32 %v1163, %v1344
    %v1363 = vadd.f32 %v1164, %v1347
    %v1364 = vadd.f32 %v1165, %v1349
    %v1365 = vadd.f32 %v1166, %v1352
    %v1366 = vadd.f32 %v1167, %v1354
    %v1367 = vadd.f32 %v1168, %v1357
    %v1368 = vadd.f32 %v1169, %v1359
    %v1369 = vmax.f32 %v1361, 0.0
    %v1370 = vmax.f32 %v1362, 0.0
    %v1371 = vmax.f32 %v1363, 0.0
    %v1372 = vmax.f32 %v1364, 0.0
    %v1373 = vmax.f32 %v1365, 0.0
    %v1374 = vmax.f32 %v1366, 0.0
    %v1375 = vmax.f32 %v1367, 0.0
    %v1376 = vmax.f32 %v1368, 0.0
    %v1385 = vrot.slane %v1369, 6
    %v1386 = vrot.slane %v1370, 6
    %v1387 = vsel %vm158, %v1385, %v1386
    %v1388 = vrot.slane %v1371, 6
    %v1389 = vsel %vm158, %v1386, %v1388
    %v1390 = vrot.slane %v1372, 6
    %v1391 = vsel %vm158, %v1388, %v1390
    %v1392 = vrot.slane %v1373, 6
    %v1393 = vsel %vm158, %v1390, %v1392
    %v1394 = vrot.slane %v1374, 6
    %v1395 = vsel %vm158, %v1392, %v1394
    %v1396 = vrot.slane %v1375, 6
    %v1397 = vsel %vm158, %v1394, %v1396
    %v1398 = vrot.slane %v1376, 6
    %v1399 = vsel %vm158, %v1396, %v1398
    %1409 = vst.msk [vmem:[#allocation2 + $0x20] sm:$0xfc] %vm183, %v1385
    %1410 = vst.msk [vmem:[#allocation2 + $0x30] sm:$0xff] %vm29, %v1387
    %1411 = vst.msk [vmem:[#allocation2 + $0x40] sm:$0xff] %vm29, %v1389
    %1412 = vst.msk [vmem:[#allocation2 + $0x50] sm:$0xff] %vm29, %v1391
    %1413 = vst.msk [vmem:[#allocation2 + $0x60] sm:$0xff] %vm29, %v1393
    %1414 = vst.msk [vmem:[#allocation2 + $0x70] sm:$0xff] %vm29, %v1395
    %1415 = vst.msk [vmem:[#allocation2 + $0x80] sm:$0xff] %vm29, %v1397
    %1416 = vst.msk [vmem:[#allocation2 + $0x90] sm:$0xff] %vm29, %v1399
    %1417 = vst.msk [vmem:[#allocation2 + $0xa0] sm:$0x3] %vm192, %v1398
    %v1418 = vrot.slane %v1369, 7
    %v1419 = vrot.slane %v1370, 7
    %v1420 = vsel %vm194, %v1418, %v1419
    %v1421 = vrot.slane %v1371, 7
    %v1422 = vsel %vm194, %v1419, %v1421
    %v1423 = vrot.slane %v1372, 7
    %v1424 = vsel %vm194, %v1421, %v1423
    %v1425 = vrot.slane %v1373, 7
    %v1426 = vsel %vm194, %v1423, %v1425
    %v1427 = vrot.slane %v1374, 7
    %v1428 = vsel %vm194, %v1425, %v1427
    %v1429 = vrot.slane %v1375, 7
    %v1430 = vsel %vm194, %v1427, %v1429
    %v1431 = vrot.slane %v1376, 7
    %v1432 = vsel %vm194, %v1429, %v1431
    %1433 = vrot.lane.b32.xlu0 %v1418, 32
    %v1434 = vpop.permute.xlu0 %1433
    %1435 = vrot.lane.b32.xlu0 %v1420, 32
    %v1436 = vpop.permute.xlu0 %1435
    %1437 = vrot.lane.b32.xlu0 %v1422, 32
    %v1438 = vpop.permute.xlu0 %1437
    %1439 = vrot.lane.b32.xlu0 %v1424, 32
    %v1440 = vpop.permute.xlu0 %1439
    %1441 = vrot.lane.b32.xlu0 %v1426, 32
    %v1442 = vpop.permute.xlu0 %1441
    %1443 = vrot.lane.b32.xlu0 %v1428, 32
    %v1444 = vpop.permute.xlu0 %1443
    %1445 = vrot.lane.b32.xlu0 %v1430, 32
    %v1446 = vpop.permute.xlu0 %1445
    %1447 = vrot.lane.b32.xlu0 %v1432, 32
    %v1448 = vpop.permute.xlu0 %1447
    %1449 = vrot.lane.b32.xlu0 %v1431, 32
    %v1450 = vpop.permute.xlu0 %1449
    %1460 = vst.msk [vmem:[#allocation2 + $0x20] sm:$0xfe] %vm237, %v1434
    %1461 = vst.msk [vmem:[#allocation2 + $0x30] sm:$0xff] %vm239, %v1436
    %1462 = vst.msk [vmem:[#allocation2 + $0x40] sm:$0xff] %vm239, %v1438
    %1463 = vst.msk [vmem:[#allocation2 + $0x50] sm:$0xff] %vm239, %v1440
    %1464 = vst.msk [vmem:[#allocation2 + $0x60] sm:$0xff] %vm239, %v1442
    %1465 = vst.msk [vmem:[#allocation2 + $0x70] sm:$0xff] %vm239, %v1444
    %1466 = vst.msk [vmem:[#allocation2 + $0x80] sm:$0xff] %vm239, %v1446
    %1467 = vst.msk [vmem:[#allocation2 + $0x90] sm:$0xff] %vm239, %v1448
    %1468 = vst.msk [vmem:[#allocation2 + $0xa0] sm:$0x1] %vm247, %v1450
    %1469 = vrot.lane.b32.xlu0 %v1369, 64
    %v1470 = vpop.permute.xlu0 %1469
    %1471 = vrot.lane.b32.xlu0 %v1370, 64
    %v1472 = vpop.permute.xlu0 %1471
    %1473 = vrot.lane.b32.xlu0 %v1371, 64
    %v1474 = vpop.permute.xlu0 %1473
    %1475 = vrot.lane.b32.xlu0 %v1372, 64
    %v1476 = vpop.permute.xlu0 %1475
    %1477 = vrot.lane.b32.xlu0 %v1373, 64
    %v1478 = vpop.permute.xlu0 %1477
    %1479 = vrot.lane.b32.xlu0 %v1374, 64
    %v1480 = vpop.permute.xlu0 %1479
    %1481 = vrot.lane.b32.xlu0 %v1375, 64
    %v1482 = vpop.permute.xlu0 %1481
    %1483 = vrot.lane.b32.xlu0 %v1376, 64
    %v1484 = vpop.permute.xlu0 %1483
    %1493 = vst.msk [vmem:[#allocation2 + $0x20] sm:$0xff] %vm273, %v1470
    %1494 = vst.msk [vmem:[#allocation2 + $0x30] sm:$0xff] %vm273, %v1472
    %1495 = vst.msk [vmem:[#allocation2 + $0x40] sm:$0xff] %vm273, %v1474
    %1496 = vst.msk [vmem:[#allocation2 + $0x50] sm:$0xff] %vm273, %v1476
    %1497 = vst.msk [vmem:[#allocation2 + $0x60] sm:$0xff] %vm273, %v1478
    %1498 = vst.msk [vmem:[#allocation2 + $0x70] sm:$0xff] %vm273, %v1480
    %1499 = vst.msk [vmem:[#allocation2 + $0x80] sm:$0xff] %vm273, %v1482
    %1500 = vst.msk [vmem:[#allocation2 + $0x90] sm:$0xff] %vm273, %v1484
    %v1501 = vrot.slane %v1369, 1
    %v1502 = vrot.slane %v1370, 1
    %v1503 = vsel %vm282, %v1501, %v1502
    %v1504 = vrot.slane %v1371, 1
    %v1505 = vsel %vm282, %v1502, %v1504
    %v1506 = vrot.slane %v1372, 1
    %v1507 = vsel %vm282, %v1504, %v1506
    %v1508 = vrot.slane %v1373, 1
    %v1509 = vsel %vm282, %v1506, %v1508
    %v1510 = vrot.slane %v1374, 1
    %v1511 = vsel %vm282, %v1508, %v1510
    %v1512 = vrot.slane %v1375, 1
    %v1513 = vsel %vm282, %v1510, %v1512
    %v1514 = vrot.slane %v1376, 1
    %v1515 = vsel %vm282, %v1512, %v1514
    %1516 = vrot.lane.b32.xlu0 %v1501, 96
    %v1517 = vpop.permute.xlu0 %1516
    %1518 = vrot.lane.b32.xlu0 %v1503, 96
    %v1519 = vpop.permute.xlu0 %1518
    %1520 = vrot.lane.b32.xlu0 %v1505, 96
    %v1521 = vpop.permute.xlu0 %1520
    %1522 = vrot.lane.b32.xlu0 %v1507, 96
    %v1523 = vpop.permute.xlu0 %1522
    %1524 = vrot.lane.b32.xlu0 %v1509, 96
    %v1525 = vpop.permute.xlu0 %1524
    %1526 = vrot.lane.b32.xlu0 %v1511, 96
    %v1527 = vpop.permute.xlu0 %1526
    %1528 = vrot.lane.b32.xlu0 %v1513, 96
    %v1529 = vpop.permute.xlu0 %1528
    %1530 = vrot.lane.b32.xlu0 %v1515, 96
    %v1531 = vpop.permute.xlu0 %1530
    %1532 = vrot.lane.b32.xlu0 %v1514, 96
    %v1533 = vpop.permute.xlu0 %1532
    %1543 = vst.msk [vmem:[#allocation2 + $0x10] sm:$0x80] %vm325, %v1517
    %1544 = vst.msk [vmem:[#allocation2 + $0x20] sm:$0xff] %vm327, %v1519
    %1545 = vst.msk [vmem:[#allocation2 + $0x30] sm:$0xff] %vm327, %v1521
    %1546 = vst.msk [vmem:[#allocation2 + $0x40] sm:$0xff] %vm327, %v1523
    %1547 = vst.msk [vmem:[#allocation2 + $0x50] sm:$0xff] %vm327, %v1525
    %1548 = vst.msk [vmem:[#allocation2 + $0x60] sm:$0xff] %vm327, %v1527
    %1549 = vst.msk [vmem:[#allocation2 + $0x70] sm:$0xff] %vm327, %v1529
    %1550 = vst.msk [vmem:[#allocation2 + $0x80] sm:$0xff] %vm327, %v1531
    %1551 = vst.msk [vmem:[#allocation2 + $0x90] sm:$0x7f] %vm335, %v1533
    %v1552 = vrot.slane %v1369, 2
    %v1553 = vrot.slane %v1370, 2
    %v1554 = vsel %vm337, %v1552, %v1553
    %v1555 = vrot.slane %v1371, 2
    %v1556 = vsel %vm337, %v1553, %v1555
    %v1557 = vrot.slane %v1372, 2
    %v1558 = vsel %vm337, %v1555, %v1557
    %v1559 = vrot.slane %v1373, 2
    %v1560 = vsel %vm337, %v1557, %v1559
    %v1561 = vrot.slane %v1374, 2
    %v1562 = vsel %vm337, %v1559, %v1561
    %v1563 = vrot.slane %v1375, 2
    %v1564 = vsel %vm337, %v1561, %v1563
    %v1565 = vrot.slane %v1376, 2
    %v1566 = vsel %vm337, %v1563, %v1565
    %1576 = vst.msk [vmem:[#allocation2 + $0x18] sm:$0xc0] %vm362, %v1552
    %1577 = vst.msk [vmem:[#allocation2 + $0x28] sm:$0xff] %vm29, %v1554
    %1578 = vst.msk [vmem:[#allocation2 + $0x38] sm:$0xff] %vm29, %v1556
    %1579 = vst.msk [vmem:[#allocation2 + $0x48] sm:$0xff] %vm29, %v1558
    %1580 = vst.msk [vmem:[#allocation2 + $0x58] sm:$0xff] %vm29, %v1560
    %1581 = vst.msk [vmem:[#allocation2 + $0x68] sm:$0xff] %vm29, %v1562
    %1582 = vst.msk [vmem:[#allocation2 + $0x78] sm:$0xff] %vm29, %v1564
    %1583 = vst.msk [vmem:[#allocation2 + $0x88] sm:$0xff] %vm29, %v1566
    %1584 = vst.msk [vmem:[#allocation2 + $0x98] sm:$0x3f] %vm371, %v1565
    %v1585 = vld [vmem:[%s5 + $0x2] sm:$0x1]
    %v1586 = vld [vmem:[#allocation2] sm:$0xff]
    %v1587 = vld [vmem:[#allocation2 + $0x8] sm:$0xff]
    %v1588 = vld [vmem:[#allocation2 + $0x10] sm:$0xff]
    %v1589 = vld [vmem:[#allocation2 + $0x18] sm:$0xff]
    %v1590 = vld [vmem:[#allocation2 + $0x20] sm:$0xff]
    %v1591 = vld [vmem:[#allocation2 + $0x28] sm:$0xff]
    %v1592 = vld [vmem:[#allocation2 + $0x30] sm:$0xff]
    %v1593 = vld [vmem:[#allocation2 + $0x38] sm:$0xff]
    %v1594 = vld [vmem:[#allocation2 + $0x40] sm:$0xff]
    %v1595 = vld [vmem:[#allocation2 + $0x48] sm:$0xff]
    %v1596 = vld [vmem:[#allocation2 + $0x50] sm:$0xff]
    %v1597 = vld [vmem:[#allocation2 + $0x58] sm:$0xff]
    %v1598 = vld [vmem:[#allocation2 + $0x60] sm:$0xff]
    %v1599 = vld [vmem:[#allocation2 + $0x68] sm:$0xff]
    %v1600 = vld [vmem:[#allocation2 + $0x70] sm:$0xff]
    %v1601 = vld [vmem:[#allocation2 + $0x78] sm:$0xff]
    %v1602 = vmul.f32 %v1586, %v134
    %v1603 = vmul.f32 %v1587, %v135
    %v1604 = vmul.f32 %v1588, %v136
    %v1605 = vmul.f32 %v1589, %v137
    %v1606 = vmul.f32 %v1590, %v138
    %v1607 = vmul.f32 %v1591, %v139
    %v1608 = vmul.f32 %v1592, %v140
    %v1609 = vmul.f32 %v1593, %v141
    %v1610 = vmul.f32 %v1594, %v142
    %v1611 = vmul.f32 %v1595, %v143
    %v1612 = vmul.f32 %v1596, %v144
    %v1613 = vmul.f32 %v1597, %v145
    %v1614 = vmul.f32 %v1598, %v146
    %v1615 = vmul.f32 %v1599, %v147
    %v1616 = vmul.f32 %v1600, %v148
    %v1617 = vmul.f32 %v1601, %v149
    %v1618 = vpack.c.bf16 %v1604, %v1602
    %v1619 = vpack.c.bf16 %v1605, %v1603
    %v1620 = vpack.c.bf16 %v1608, %v1606
    %v1621 = vpack.c.bf16 %v1609, %v1607
    %v1622 = vpack.c.bf16 %v1612, %v1610
    %v1623 = vpack.c.bf16 %v1613, %v1611
    %v1624 = vpack.c.bf16 %v1616, %v1614
    %v1625 = vpack.c.bf16 %v1617, %v1615
    %v1626 = vld [vmem:[%s3] sm:$0xf]
    %v1627 = vld [vmem:[%s3 + $0x4] sm:$0xf]
    %v1628 = vld [vmem:[%s3 + $0x8] sm:$0xf]
    %v1629 = vld [vmem:[%s3 + $0xc] sm:$0xf]
    %v1630 = vld [vmem:[%s3 + $0x10] sm:$0xf]
    %v1631 = vld [vmem:[%s3 + $0x14] sm:$0xf]
    %v1632 = vld [vmem:[%s3 + $0x18] sm:$0xf]
    %v1633 = vld [vmem:[%s3 + $0x1c] sm:$0xf]
    %v1634 = vld [vmem:[%s3 + $0x20] sm:$0xf]
    %v1635 = vld [vmem:[%s3 + $0x24] sm:$0xf]
    %v1636 = vld [vmem:[%s3 + $0x28] sm:$0xf]
    %v1637 = vld [vmem:[%s3 + $0x2c] sm:$0xf]
    %v1638 = vld [vmem:[%s3 + $0x30] sm:$0xf]
    %v1639 = vld [vmem:[%s3 + $0x34] sm:$0xf]
    %v1640 = vld [vmem:[%s3 + $0x38] sm:$0xf]
    %v1641 = vld [vmem:[%s3 + $0x3c] sm:$0xf]
    %v1642 = vld [vmem:[%s3 + $0x40] sm:$0xf]
    %v1643 = vld [vmem:[%s3 + $0x44] sm:$0xf]
    %v1644 = vld [vmem:[%s3 + $0x48] sm:$0xf]
    %v1645 = vld [vmem:[%s3 + $0x4c] sm:$0xf]
    %v1666 = vunpack.c.l.b16 %v1626
    %v1667 = vunpack.c.l.b16 %v1627
    %v1668 = vunpack.c.l.b16 %v1628
    %v1669 = vunpack.c.l.b16 %v1629
    %v1670 = vunpack.c.l.b16 %v1630
    %v1671 = vunpack.c.l.b16 %v1631
    %v1672 = vunpack.c.l.b16 %v1632
    %v1673 = vunpack.c.l.b16 %v1633
    %v1674 = vunpack.c.l.b16 %v1634
    %v1675 = vunpack.c.l.b16 %v1635
    %v1676 = vunpack.c.l.b16 %v1636
    %v1677 = vunpack.c.l.b16 %v1637
    %v1678 = vunpack.c.l.b16 %v1638
    %v1679 = vunpack.c.l.b16 %v1639
    %v1680 = vunpack.c.l.b16 %v1640
    %v1681 = vunpack.c.l.b16 %v1641
    %v1682 = vunpack.c.l.b16 %v1642
    %v1683 = vunpack.c.l.b16 %v1643
    %v1684 = vunpack.c.l.b16 %v1644
    %v1685 = vunpack.c.l.b16 %v1645
    %v1686 = vpack.c.b16 %v1667, %v1666
    %v1687 = vpack.c.b16 %v1669, %v1668
    %v1688 = vpack.c.b16 %v1671, %v1670
    %v1689 = vpack.c.b16 %v1673, %v1672
    %v1690 = vpack.c.b16 %v1675, %v1674
    %v1691 = vpack.c.b16 %v1677, %v1676
    %v1692 = vpack.c.b16 %v1679, %v1678
    %v1693 = vpack.c.b16 %v1681, %v1680
    %v1694 = vpack.c.b16 %v1683, %v1682
    %v1695 = vpack.c.b16 %v1685, %v1684
    %v1707 = vsel %vm29, %v1619, 0
    %v1710 = vsel %vm29, %v1621, 0
    %v1713 = vsel %vm29, %v1623, 0
    %v1716 = vsel %vm29, %v1625, 0
    %1718 = vmatpush.bf16.msra.mxu0 %v1693
    %1719 = vmatpush.bf16.msra.mxu0 %v1692
    %1720 = vmatpush.bf16.msra.mxu0 %v1691
    %1721 = vmatpush.bf16.msra.mxu0 %v1690
    %1722 = vmatpush.bf16.msra.mxu0 %v1689
    %1723 = vmatpush.bf16.msra.mxu0 %v1688
    %1724 = vmatpush.bf16.msra.mxu0 %v1687
    %1725 = vmatpush.bf16.msra.mxu0 %v1686
    %1726 = vmatmul.bf16.gmra.mxu0 %v1618
    %v1727 = vpop.f32.mrf.mxu0
    %v1728 = vadd.f32 0.0, %v1727
    %v1729 = vpop.f32.mrf.mxu0
    %v1730 = vadd.f32 0.0, %v1729
    %1731 = vmatmul.bf16.gmra.mxu0 %v1620
    %v1732 = vpop.f32.mrf.mxu0
    %v1733 = vadd.f32 0.0, %v1732
    %v1734 = vpop.f32.mrf.mxu0
    %v1735 = vadd.f32 0.0, %v1734
    %1736 = vmatmul.bf16.gmra.mxu0 %v1622
    %v1737 = vpop.f32.mrf.mxu0
    %v1738 = vadd.f32 0.0, %v1737
    %v1739 = vpop.f32.mrf.mxu0
    %v1740 = vadd.f32 0.0, %v1739
    %1741 = vmatmul.bf16.gmra.mxu0 %v1624
    %v1742 = vpop.f32.mrf.mxu0
    %v1743 = vadd.f32 0.0, %v1742
    %v1744 = vpop.f32.mrf.mxu0
    %v1745 = vadd.f32 0.0, %v1744
    %1746 = vdwg.mxu0
    %1747 = vmatpush.bf16.msra.mxu0 0
    %1748 = vmatpush.bf16.msra.mxu0 0
    %1749 = vmatpush.bf16.msra.mxu0 0
    %1750 = vmatpush.bf16.msra.mxu0 0
    %1751 = vmatpush.bf16.msra.mxu0 0
    %1752 = vmatpush.bf16.msra.mxu0 0
    %1753 = vmatpush.bf16.msra.mxu0 %v1695
    %1754 = vmatpush.bf16.msra.mxu0 %v1694
    %1755 = vmatmul.bf16.gmra.mxu0 %v1707
    %v1756 = vpop.f32.mrf.mxu0
    %v1757 = vadd.f32 %v1728, %v1756
    %v1758 = vpop.f32.mrf.mxu0
    %v1759 = vadd.f32 %v1730, %v1758
    %1760 = vmatmul.bf16.gmra.mxu0 %v1710
    %v1761 = vpop.f32.mrf.mxu0
    %v1762 = vadd.f32 %v1733, %v1761
    %v1763 = vpop.f32.mrf.mxu0
    %v1764 = vadd.f32 %v1735, %v1763
    %1765 = vmatmul.bf16.gmra.mxu0 %v1713
    %v1766 = vpop.f32.mrf.mxu0
    %v1767 = vadd.f32 %v1738, %v1766
    %v1768 = vpop.f32.mrf.mxu0
    %v1769 = vadd.f32 %v1740, %v1768
    %1770 = vmatmul.bf16.gmra.mxu0 %v1716
    %v1771 = vpop.f32.mrf.mxu0
    %v1772 = vadd.f32 %v1743, %v1771
    %v1773 = vpop.f32.mrf.mxu0
    %v1774 = vadd.f32 %v1745, %v1773
    %1775 = vdwg.mxu0
    %v1776 = vperm.slane %v1585, 0
    %v1777 = vadd.f32 %v1776, %v1757
    %v1778 = vadd.f32 %v1776, %v1759
    %v1779 = vadd.f32 %v1776, %v1762
    %v1780 = vadd.f32 %v1776, %v1764
    %v1781 = vadd.f32 %v1776, %v1767
    %v1782 = vadd.f32 %v1776, %v1769
    %v1783 = vadd.f32 %v1776, %v1772
    %v1784 = vadd.f32 %v1776, %v1774
    %v1785 = vld [vmem:[#allocation2 + $0x10] sm:$0xff]
    %v1786 = vld [vmem:[#allocation2 + $0x18] sm:$0xff]
    %v1787 = vld [vmem:[#allocation2 + $0x20] sm:$0xff]
    %v1788 = vld [vmem:[#allocation2 + $0x28] sm:$0xff]
    %v1789 = vld [vmem:[#allocation2 + $0x30] sm:$0xff]
    %v1790 = vld [vmem:[#allocation2 + $0x38] sm:$0xff]
    %v1791 = vld [vmem:[#allocation2 + $0x40] sm:$0xff]
    %v1792 = vld [vmem:[#allocation2 + $0x48] sm:$0xff]
    %v1793 = vld [vmem:[#allocation2 + $0x50] sm:$0xff]
    %v1794 = vld [vmem:[#allocation2 + $0x58] sm:$0xff]
    %v1795 = vld [vmem:[#allocation2 + $0x60] sm:$0xff]
    %v1796 = vld [vmem:[#allocation2 + $0x68] sm:$0xff]
    %v1797 = vld [vmem:[#allocation2 + $0x70] sm:$0xff]
    %v1798 = vld [vmem:[#allocation2 + $0x78] sm:$0xff]
    %v1799 = vld [vmem:[#allocation2 + $0x80] sm:$0xff]
    %v1800 = vld [vmem:[#allocation2 + $0x88] sm:$0xff]
    %v1801 = vmul.f32 %v1785, %v134
    %v1802 = vmul.f32 %v1786, %v135
    %v1803 = vmul.f32 %v1787, %v136
    %v1804 = vmul.f32 %v1788, %v137
    %v1805 = vmul.f32 %v1789, %v138
    %v1806 = vmul.f32 %v1790, %v139
    %v1807 = vmul.f32 %v1791, %v140
    %v1808 = vmul.f32 %v1792, %v141
    %v1809 = vmul.f32 %v1793, %v142
    %v1810 = vmul.f32 %v1794, %v143
    %v1811 = vmul.f32 %v1795, %v144
    %v1812 = vmul.f32 %v1796, %v145
    %v1813 = vmul.f32 %v1797, %v146
    %v1814 = vmul.f32 %v1798, %v147
    %v1815 = vmul.f32 %v1799, %v148
    %v1816 = vmul.f32 %v1800, %v149
    %v1817 = vpack.c.bf16 %v1803, %v1801
    %v1818 = vpack.c.bf16 %v1804, %v1802
    %v1819 = vpack.c.bf16 %v1807, %v1805
    %v1820 = vpack.c.bf16 %v1808, %v1806
    %v1821 = vpack.c.bf16 %v1811, %v1809
    %v1822 = vpack.c.bf16 %v1812, %v1810
    %v1823 = vpack.c.bf16 %v1815, %v1813
    %v1824 = vpack.c.bf16 %v1816, %v1814
    %s1825 = scalar_lea.vmem %s3, 80
    %v1826 = vld [vmem:[%s1825] sm:$0xf]
    %v1827 = vld [vmem:[%s1825 + $0x4] sm:$0xf]
    %v1828 = vld [vmem:[%s1825 + $0x8] sm:$0xf]
    %v1829 = vld [vmem:[%s1825 + $0xc] sm:$0xf]
    %v1830 = vld [vmem:[%s1825 + $0x10] sm:$0xf]
    %v1831 = vld [vmem:[%s1825 + $0x14] sm:$0xf]
    %v1832 = vld [vmem:[%s1825 + $0x18] sm:$0xf]
    %v1833 = vld [vmem:[%s1825 + $0x1c] sm:$0xf]
    %v1834 = vld [vmem:[%s1825 + $0x20] sm:$0xf]
    %v1835 = vld [vmem:[%s1825 + $0x24] sm:$0xf]
    %v1836 = vld [vmem:[%s1825 + $0x28] sm:$0xf]
    %v1837 = vld [vmem:[%s1825 + $0x2c] sm:$0xf]
    %v1838 = vld [vmem:[%s1825 + $0x30] sm:$0xf]
    %v1839 = vld [vmem:[%s1825 + $0x34] sm:$0xf]
    %v1840 = vld [vmem:[%s1825 + $0x38] sm:$0xf]
    %v1841 = vld [vmem:[%s1825 + $0x3c] sm:$0xf]
    %v1842 = vld [vmem:[%s1825 + $0x40] sm:$0xf]
    %v1843 = vld [vmem:[%s1825 + $0x44] sm:$0xf]
    %v1844 = vld [vmem:[%s1825 + $0x48] sm:$0xf]
    %v1845 = vld [vmem:[%s1825 + $0x4c] sm:$0xf]
    %v1866 = vunpack.c.l.b16 %v1826
    %v1867 = vunpack.c.l.b16 %v1827
    %v1868 = vunpack.c.l.b16 %v1828
    %v1869 = vunpack.c.l.b16 %v1829
    %v1870 = vunpack.c.l.b16 %v1830
    %v1871 = vunpack.c.l.b16 %v1831
    %v1872 = vunpack.c.l.b16 %v1832
    %v1873 = vunpack.c.l.b16 %v1833
    %v1874 = vunpack.c.l.b16 %v1834
    %v1875 = vunpack.c.l.b16 %v1835
    %v1876 = vunpack.c.l.b16 %v1836
    %v1877 = vunpack.c.l.b16 %v1837
    %v1878 = vunpack.c.l.b16 %v1838
    %v1879 = vunpack.c.l.b16 %v1839
    %v1880 = vunpack.c.l.b16 %v1840
    %v1881 = vunpack.c.l.b16 %v1841
    %v1882 = vunpack.c.l.b16 %v1842
    %v1883 = vunpack.c.l.b16 %v1843
    %v1884 = vunpack.c.l.b16 %v1844
    %v1885 = vunpack.c.l.b16 %v1845
    %v1886 = vpack.c.b16 %v1867, %v1866
    %v1887 = vpack.c.b16 %v1869, %v1868
    %v1888 = vpack.c.b16 %v1871, %v1870
    %v1889 = vpack.c.b16 %v1873, %v1872
    %v1890 = vpack.c.b16 %v1875, %v1874
    %v1891 = vpack.c.b16 %v1877, %v1876
    %v1892 = vpack.c.b16 %v1879, %v1878
    %v1893 = vpack.c.b16 %v1881, %v1880
    %v1894 = vpack.c.b16 %v1883, %v1882
    %v1895 = vpack.c.b16 %v1885, %v1884
    %v1907 = vsel %vm29, %v1818, 0
    %v1910 = vsel %vm29, %v1820, 0
    %v1913 = vsel %vm29, %v1822, 0
    %v1916 = vsel %vm29, %v1824, 0
    %1918 = vmatpush.bf16.msra.mxu0 %v1893
    %1919 = vmatpush.bf16.msra.mxu0 %v1892
    %1920 = vmatpush.bf16.msra.mxu0 %v1891
    %1921 = vmatpush.bf16.msra.mxu0 %v1890
    %1922 = vmatpush.bf16.msra.mxu0 %v1889
    %1923 = vmatpush.bf16.msra.mxu0 %v1888
    %1924 = vmatpush.bf16.msra.mxu0 %v1887
    %1925 = vmatpush.bf16.msra.mxu0 %v1886
    %1926 = vmatmul.bf16.gmra.mxu0 %v1817
    %v1927 = vpop.f32.mrf.mxu0
    %v1928 = vadd.f32 0.0, %v1927
    %v1929 = vpop.f32.mrf.mxu0
    %v1930 = vadd.f32 0.0, %v1929
    %1931 = vmatmul.bf16.gmra.mxu0 %v1819
    %v1932 = vpop.f32.mrf.mxu0
    %v1933 = vadd.f32 0.0, %v1932
    %v1934 = vpop.f32.mrf.mxu0
    %v1935 = vadd.f32 0.0, %v1934
    %1936 = vmatmul.bf16.gmra.mxu0 %v1821
    %v1937 = vpop.f32.mrf.mxu0
    %v1938 = vadd.f32 0.0, %v1937
    %v1939 = vpop.f32.mrf.mxu0
    %v1940 = vadd.f32 0.0, %v1939
    %1941 = vmatmul.bf16.gmra.mxu0 %v1823
    %v1942 = vpop.f32.mrf.mxu0
    %v1943 = vadd.f32 0.0, %v1942
    %v1944 = vpop.f32.mrf.mxu0
    %v1945 = vadd.f32 0.0, %v1944
    %1946 = vdwg.mxu0
    %1947 = vmatpush.bf16.msra.mxu0 0
    %1948 = vmatpush.bf16.msra.mxu0 0
    %1949 = vmatpush.bf16.msra.mxu0 0
    %1950 = vmatpush.bf16.msra.mxu0 0
    %1951 = vmatpush.bf16.msra.mxu0 0
    %1952 = vmatpush.bf16.msra.mxu0 0
    %1953 = vmatpush.bf16.msra.mxu0 %v1895
    %1954 = vmatpush.bf16.msra.mxu0 %v1894
    %1955 = vmatmul.bf16.gmra.mxu0 %v1907
    %v1956 = vpop.f32.mrf.mxu0
    %v1957 = vadd.f32 %v1928, %v1956
    %v1958 = vpop.f32.mrf.mxu0
    %v1959 = vadd.f32 %v1930, %v1958
    %1960 = vmatmul.bf16.gmra.mxu0 %v1910
    %v1961 = vpop.f32.mrf.mxu0
    %v1962 = vadd.f32 %v1933, %v1961
    %v1963 = vpop.f32.mrf.mxu0
    %v1964 = vadd.f32 %v1935, %v1963
    %1965 = vmatmul.bf16.gmra.mxu0 %v1913
    %v1966 = vpop.f32.mrf.mxu0
    %v1967 = vadd.f32 %v1938, %v1966
    %v1968 = vpop.f32.mrf.mxu0
    %v1969 = vadd.f32 %v1940, %v1968
    %1970 = vmatmul.bf16.gmra.mxu0 %v1916
    %v1971 = vpop.f32.mrf.mxu0
    %v1972 = vadd.f32 %v1943, %v1971
    %v1973 = vpop.f32.mrf.mxu0
    %v1974 = vadd.f32 %v1945, %v1973
    %1975 = vdwg.mxu0
    %v1976 = vadd.f32 %v1777, %v1957
    %v1977 = vadd.f32 %v1778, %v1959
    %v1978 = vadd.f32 %v1779, %v1962
    %v1979 = vadd.f32 %v1780, %v1964
    %v1980 = vadd.f32 %v1781, %v1967
    %v1981 = vadd.f32 %v1782, %v1969
    %v1982 = vadd.f32 %v1783, %v1972
    %v1983 = vadd.f32 %v1784, %v1974
    %v1984 = vld [vmem:[#allocation2 + $0x20] sm:$0xff]
    %v1985 = vld [vmem:[#allocation2 + $0x28] sm:$0xff]
    %v1986 = vld [vmem:[#allocation2 + $0x30] sm:$0xff]
    %v1987 = vld [vmem:[#allocation2 + $0x38] sm:$0xff]
    %v1988 = vld [vmem:[#allocation2 + $0x40] sm:$0xff]
    %v1989 = vld [vmem:[#allocation2 + $0x48] sm:$0xff]
    %v1990 = vld [vmem:[#allocation2 + $0x50] sm:$0xff]
    %v1991 = vld [vmem:[#allocation2 + $0x58] sm:$0xff]
    %v1992 = vld [vmem:[#allocation2 + $0x60] sm:$0xff]
    %v1993 = vld [vmem:[#allocation2 + $0x68] sm:$0xff]
    %v1994 = vld [vmem:[#allocation2 + $0x70] sm:$0xff]
    %v1995 = vld [vmem:[#allocation2 + $0x78] sm:$0xff]
    %v1996 = vld [vmem:[#allocation2 + $0x80] sm:$0xff]
    %v1997 = vld [vmem:[#allocation2 + $0x88] sm:$0xff]
    %v1998 = vld [vmem:[#allocation2 + $0x90] sm:$0xff]
    %v1999 = vld [vmem:[#allocation2 + $0x98] sm:$0xff]
    %v2000 = vmul.f32 %v1984, %v134
    %v2001 = vmul.f32 %v1985, %v135
    %v2002 = vmul.f32 %v1986, %v136
    %v2003 = vmul.f32 %v1987, %v137
    %v2004 = vmul.f32 %v1988, %v138
    %v2005 = vmul.f32 %v1989, %v139
    %v2006 = vmul.f32 %v1990, %v140
    %v2007 = vmul.f32 %v1991, %v141
    %v2008 = vmul.f32 %v1992, %v142
    %v2009 = vmul.f32 %v1993, %v143
    %v2010 = vmul.f32 %v1994, %v144
    %v2011 = vmul.f32 %v1995, %v145
    %v2012 = vmul.f32 %v1996, %v146
    %v2013 = vmul.f32 %v1997, %v147
    %v2014 = vmul.f32 %v1998, %v148
    %v2015 = vmul.f32 %v1999, %v149
    %v2016 = vpack.c.bf16 %v2002, %v2000
    %v2017 = vpack.c.bf16 %v2003, %v2001
    %v2018 = vpack.c.bf16 %v2006, %v2004
    %v2019 = vpack.c.bf16 %v2007, %v2005
    %v2020 = vpack.c.bf16 %v2010, %v2008
    %v2021 = vpack.c.bf16 %v2011, %v2009
    %v2022 = vpack.c.bf16 %v2014, %v2012
    %v2023 = vpack.c.bf16 %v2015, %v2013
    %s2024 = scalar_lea.vmem %s3, 160
    %v2025 = vld [vmem:[%s2024] sm:$0xf]
    %v2026 = vld [vmem:[%s2024 + $0x4] sm:$0xf]
    %v2027 = vld [vmem:[%s2024 + $0x8] sm:$0xf]
    %v2028 = vld [vmem:[%s2024 + $0xc] sm:$0xf]
    %v2029 = vld [vmem:[%s2024 + $0x10] sm:$0xf]
    %v2030 = vld [vmem:[%s2024 + $0x14] sm:$0xf]
    %v2031 = vld [vmem:[%s2024 + $0x18] sm:$0xf]
    %v2032 = vld [vmem:[%s2024 + $0x1c] sm:$0xf]
    %v2033 = vld [vmem:[%s2024 + $0x20] sm:$0xf]
    %v2034 = vld [vmem:[%s2024 + $0x24] sm:$0xf]
    %v2035 = vld [vmem:[%s2024 + $0x28] sm:$0xf]
    %v2036 = vld [vmem:[%s2024 + $0x2c] sm:$0xf]
    %v2037 = vld [vmem:[%s2024 + $0x30] sm:$0xf]
    %v2038 = vld [vmem:[%s2024 + $0x34] sm:$0xf]
    %v2039 = vld [vmem:[%s2024 + $0x38] sm:$0xf]
    %v2040 = vld [vmem:[%s2024 + $0x3c] sm:$0xf]
    %v2041 = vld [vmem:[%s2024 + $0x40] sm:$0xf]
    %v2042 = vld [vmem:[%s2024 + $0x44] sm:$0xf]
    %v2043 = vld [vmem:[%s2024 + $0x48] sm:$0xf]
    %v2044 = vld [vmem:[%s2024 + $0x4c] sm:$0xf]
    %v2065 = vunpack.c.l.b16 %v2025
    %v2066 = vunpack.c.l.b16 %v2026
    %v2067 = vunpack.c.l.b16 %v2027
    %v2068 = vunpack.c.l.b16 %v2028
    %v2069 = vunpack.c.l.b16 %v2029
    %v2070 = vunpack.c.l.b16 %v2030
    %v2071 = vunpack.c.l.b16 %v2031
    %v2072 = vunpack.c.l.b16 %v2032
    %v2073 = vunpack.c.l.b16 %v2033
    %v2074 = vunpack.c.l.b16 %v2034
    %v2075 = vunpack.c.l.b16 %v2035
    %v2076 = vunpack.c.l.b16 %v2036
    %v2077 = vunpack.c.l.b16 %v2037
    %v2078 = vunpack.c.l.b16 %v2038
    %v2079 = vunpack.c.l.b16 %v2039
    %v2080 = vunpack.c.l.b16 %v2040
    %v2081 = vunpack.c.l.b16 %v2041
    %v2082 = vunpack.c.l.b16 %v2042
    %v2083 = vunpack.c.l.b16 %v2043
    %v2084 = vunpack.c.l.b16 %v2044
    %v2085 = vpack.c.b16 %v2066, %v2065
    %v2086 = vpack.c.b16 %v2068, %v2067
    %v2087 = vpack.c.b16 %v2070, %v2069
    %v2088 = vpack.c.b16 %v2072, %v2071
    %v2089 = vpack.c.b16 %v2074, %v2073
    %v2090 = vpack.c.b16 %v2076, %v2075
    %v2091 = vpack.c.b16 %v2078, %v2077
    %v2092 = vpack.c.b16 %v2080, %v2079
    %v2093 = vpack.c.b16 %v2082, %v2081
    %v2094 = vpack.c.b16 %v2084, %v2083
    %v2106 = vsel %vm29, %v2017, 0
    %v2109 = vsel %vm29, %v2019, 0
    %v2112 = vsel %vm29, %v2021, 0
    %v2115 = vsel %vm29, %v2023, 0
    %2117 = vmatpush.bf16.msra.mxu0 %v2092
    %2118 = vmatpush.bf16.msra.mxu0 %v2091
    %2119 = vmatpush.bf16.msra.mxu0 %v2090
    %2120 = vmatpush.bf16.msra.mxu0 %v2089
    %2121 = vmatpush.bf16.msra.mxu0 %v2088
    %2122 = vmatpush.bf16.msra.mxu0 %v2087
    %2123 = vmatpush.bf16.msra.mxu0 %v2086
    %2124 = vmatpush.bf16.msra.mxu0 %v2085
    %2125 = vmatmul.bf16.gmra.mxu0 %v2016
    %v2126 = vpop.f32.mrf.mxu0
    %v2127 = vadd.f32 0.0, %v2126
    %v2128 = vpop.f32.mrf.mxu0
    %v2129 = vadd.f32 0.0, %v2128
    %2130 = vmatmul.bf16.gmra.mxu0 %v2018
    %v2131 = vpop.f32.mrf.mxu0
    %v2132 = vadd.f32 0.0, %v2131
    %v2133 = vpop.f32.mrf.mxu0
    %v2134 = vadd.f32 0.0, %v2133
    %2135 = vmatmul.bf16.gmra.mxu0 %v2020
    %v2136 = vpop.f32.mrf.mxu0
    %v2137 = vadd.f32 0.0, %v2136
    %v2138 = vpop.f32.mrf.mxu0
    %v2139 = vadd.f32 0.0, %v2138
    %2140 = vmatmul.bf16.gmra.mxu0 %v2022
    %v2141 = vpop.f32.mrf.mxu0
    %v2142 = vadd.f32 0.0, %v2141
    %v2143 = vpop.f32.mrf.mxu0
    %v2144 = vadd.f32 0.0, %v2143
    %2145 = vdwg.mxu0
    %2146 = vmatpush.bf16.msra.mxu0 0
    %2147 = vmatpush.bf16.msra.mxu0 0
    %2148 = vmatpush.bf16.msra.mxu0 0
    %2149 = vmatpush.bf16.msra.mxu0 0
    %2150 = vmatpush.bf16.msra.mxu0 0
    %2151 = vmatpush.bf16.msra.mxu0 0
    %2152 = vmatpush.bf16.msra.mxu0 %v2094
    %2153 = vmatpush.bf16.msra.mxu0 %v2093
    %2154 = vmatmul.bf16.gmra.mxu0 %v2106
    %v2155 = vpop.f32.mrf.mxu0
    %v2156 = vadd.f32 %v2127, %v2155
    %v2157 = vpop.f32.mrf.mxu0
    %v2158 = vadd.f32 %v2129, %v2157
    %2159 = vmatmul.bf16.gmra.mxu0 %v2109
    %v2160 = vpop.f32.mrf.mxu0
    %v2161 = vadd.f32 %v2132, %v2160
    %v2162 = vpop.f32.mrf.mxu0
    %v2163 = vadd.f32 %v2134, %v2162
    %2164 = vmatmul.bf16.gmra.mxu0 %v2112
    %v2165 = vpop.f32.mrf.mxu0
    %v2166 = vadd.f32 %v2137, %v2165
    %v2167 = vpop.f32.mrf.mxu0
    %v2168 = vadd.f32 %v2139, %v2167
    %2169 = vmatmul.bf16.gmra.mxu0 %v2115
    %v2170 = vpop.f32.mrf.mxu0
    %v2171 = vadd.f32 %v2142, %v2170
    %v2172 = vpop.f32.mrf.mxu0
    %v2173 = vadd.f32 %v2144, %v2172
    %2174 = vdwg.mxu0
    %v2175 = vadd.f32 %v1976, %v2156
    %v2176 = vadd.f32 %v1977, %v2158
    %v2177 = vadd.f32 %v1978, %v2161
    %v2178 = vadd.f32 %v1979, %v2163
    %v2179 = vadd.f32 %v1980, %v2166
    %v2180 = vadd.f32 %v1981, %v2168
    %v2181 = vadd.f32 %v1982, %v2171
    %v2182 = vadd.f32 %v1983, %v2173
    %v2183 = vld [vmem:[#allocation2 + $0x30] sm:$0xff]
    %v2184 = vld [vmem:[#allocation2 + $0x38] sm:$0xff]
    %v2185 = vld [vmem:[#allocation2 + $0x40] sm:$0xff]
    %v2186 = vld [vmem:[#allocation2 + $0x48] sm:$0xff]
    %v2187 = vld [vmem:[#allocation2 + $0x50] sm:$0xff]
    %v2188 = vld [vmem:[#allocation2 + $0x58] sm:$0xff]
    %v2189 = vld [vmem:[#allocation2 + $0x60] sm:$0xff]
    %v2190 = vld [vmem:[#allocation2 + $0x68] sm:$0xff]
    %v2191 = vld [vmem:[#allocation2 + $0x70] sm:$0xff]
    %v2192 = vld [vmem:[#allocation2 + $0x78] sm:$0xff]
    %v2193 = vld [vmem:[#allocation2 + $0x80] sm:$0xff]
    %v2194 = vld [vmem:[#allocation2 + $0x88] sm:$0xff]
    %v2195 = vld [vmem:[#allocation2 + $0x90] sm:$0xff]
    %v2196 = vld [vmem:[#allocation2 + $0x98] sm:$0xff]
    %v2197 = vld [vmem:[#allocation2 + $0xa0] sm:$0xff]
    %v2198 = vld [vmem:[#allocation2 + $0xa8] sm:$0xff]
    %v2199 = vmul.f32 %v2183, %v134
    %v2200 = vmul.f32 %v2184, %v135
    %v2201 = vmul.f32 %v2185, %v136
    %v2202 = vmul.f32 %v2186, %v137
    %v2203 = vmul.f32 %v2187, %v138
    %v2204 = vmul.f32 %v2188, %v139
    %v2205 = vmul.f32 %v2189, %v140
    %v2206 = vmul.f32 %v2190, %v141
    %v2207 = vmul.f32 %v2191, %v142
    %v2208 = vmul.f32 %v2192, %v143
    %v2209 = vmul.f32 %v2193, %v144
    %v2210 = vmul.f32 %v2194, %v145
    %v2211 = vmul.f32 %v2195, %v146
    %v2212 = vmul.f32 %v2196, %v147
    %v2213 = vmul.f32 %v2197, %v148
    %v2214 = vmul.f32 %v2198, %v149
    %v2215 = vpack.c.bf16 %v2201, %v2199
    %v2216 = vpack.c.bf16 %v2202, %v2200
    %v2217 = vpack.c.bf16 %v2205, %v2203
    %v2218 = vpack.c.bf16 %v2206, %v2204
    %v2219 = vpack.c.bf16 %v2209, %v2207
    %v2220 = vpack.c.bf16 %v2210, %v2208
    %v2221 = vpack.c.bf16 %v2213, %v2211
    %v2222 = vpack.c.bf16 %v2214, %v2212
    %s2223 = scalar_lea.vmem %s3, 240
    %v2224 = vld [vmem:[%s2223] sm:$0xf]
    %v2225 = vld [vmem:[%s2223 + $0x4] sm:$0xf]
    %v2226 = vld [vmem:[%s2223 + $0x8] sm:$0xf]
    %v2227 = vld [vmem:[%s2223 + $0xc] sm:$0xf]
    %v2228 = vld [vmem:[%s2223 + $0x10] sm:$0xf]
    %v2229 = vld [vmem:[%s2223 + $0x14] sm:$0xf]
    %v2230 = vld [vmem:[%s2223 + $0x18] sm:$0xf]
    %v2231 = vld [vmem:[%s2223 + $0x1c] sm:$0xf]
    %v2232 = vld [vmem:[%s2223 + $0x20] sm:$0xf]
    %v2233 = vld [vmem:[%s2223 + $0x24] sm:$0xf]
    %v2234 = vld [vmem:[%s2223 + $0x28] sm:$0xf]
    %v2235 = vld [vmem:[%s2223 + $0x2c] sm:$0xf]
    %v2236 = vld [vmem:[%s2223 + $0x30] sm:$0xf]
    %v2237 = vld [vmem:[%s2223 + $0x34] sm:$0xf]
    %v2238 = vld [vmem:[%s2223 + $0x38] sm:$0xf]
    %v2239 = vld [vmem:[%s2223 + $0x3c] sm:$0xf]
    %v2240 = vld [vmem:[%s2223 + $0x40] sm:$0xf]
    %v2241 = vld [vmem:[%s2223 + $0x44] sm:$0xf]
    %v2242 = vld [vmem:[%s2223 + $0x48] sm:$0xf]
    %v2243 = vld [vmem:[%s2223 + $0x4c] sm:$0xf]
    %v2264 = vunpack.c.l.b16 %v2224
    %v2265 = vunpack.c.l.b16 %v2225
    %v2266 = vunpack.c.l.b16 %v2226
    %v2267 = vunpack.c.l.b16 %v2227
    %v2268 = vunpack.c.l.b16 %v2228
    %v2269 = vunpack.c.l.b16 %v2229
    %v2270 = vunpack.c.l.b16 %v2230
    %v2271 = vunpack.c.l.b16 %v2231
    %v2272 = vunpack.c.l.b16 %v2232
    %v2273 = vunpack.c.l.b16 %v2233
    %v2274 = vunpack.c.l.b16 %v2234
    %v2275 = vunpack.c.l.b16 %v2235
    %v2276 = vunpack.c.l.b16 %v2236
    %v2277 = vunpack.c.l.b16 %v2237
    %v2278 = vunpack.c.l.b16 %v2238
    %v2279 = vunpack.c.l.b16 %v2239
    %v2280 = vunpack.c.l.b16 %v2240
    %v2281 = vunpack.c.l.b16 %v2241
    %v2282 = vunpack.c.l.b16 %v2242
    %v2283 = vunpack.c.l.b16 %v2243
    %v2284 = vpack.c.b16 %v2265, %v2264
    %v2285 = vpack.c.b16 %v2267, %v2266
    %v2286 = vpack.c.b16 %v2269, %v2268
    %v2287 = vpack.c.b16 %v2271, %v2270
    %v2288 = vpack.c.b16 %v2273, %v2272
    %v2289 = vpack.c.b16 %v2275, %v2274
    %v2290 = vpack.c.b16 %v2277, %v2276
    %v2291 = vpack.c.b16 %v2279, %v2278
    %v2292 = vpack.c.b16 %v2281, %v2280
    %v2293 = vpack.c.b16 %v2283, %v2282
    %v2305 = vsel %vm29, %v2216, 0
    %v2308 = vsel %vm29, %v2218, 0
    %v2311 = vsel %vm29, %v2220, 0
    %v2314 = vsel %vm29, %v2222, 0
    %2316 = vmatpush.bf16.msra.mxu0 %v2291
    %2317 = vmatpush.bf16.msra.mxu0 %v2290
    %2318 = vmatpush.bf16.msra.mxu0 %v2289
    %2319 = vmatpush.bf16.msra.mxu0 %v2288
    %2320 = vmatpush.bf16.msra.mxu0 %v2287
    %2321 = vmatpush.bf16.msra.mxu0 %v2286
    %2322 = vmatpush.bf16.msra.mxu0 %v2285
    %2323 = vmatpush.bf16.msra.mxu0 %v2284
    %2324 = vmatmul.bf16.gmra.mxu0 %v2215
    %v2325 = vpop.f32.mrf.mxu0
    %v2326 = vadd.f32 0.0, %v2325
    %v2327 = vpop.f32.mrf.mxu0
    %v2328 = vadd.f32 0.0, %v2327
    %2329 = vmatmul.bf16.gmra.mxu0 %v2217
    %v2330 = vpop.f32.mrf.mxu0
    %v2331 = vadd.f32 0.0, %v2330
    %v2332 = vpop.f32.mrf.mxu0
    %v2333 = vadd.f32 0.0, %v2332
    %2334 = vmatmul.bf16.gmra.mxu0 %v2219
    %v2335 = vpop.f32.mrf.mxu0
    %v2336 = vadd.f32 0.0, %v2335
    %v2337 = vpop.f32.mrf.mxu0
    %v2338 = vadd.f32 0.0, %v2337
    %2339 = vmatmul.bf16.gmra.mxu0 %v2221
    %v2340 = vpop.f32.mrf.mxu0
    %v2341 = vadd.f32 0.0, %v2340
    %v2342 = vpop.f32.mrf.mxu0
    %v2343 = vadd.f32 0.0, %v2342
    %2344 = vdwg.mxu0
    %2345 = vmatpush.bf16.msra.mxu0 0
    %2346 = vmatpush.bf16.msra.mxu0 0
    %2347 = vmatpush.bf16.msra.mxu0 0
    %2348 = vmatpush.bf16.msra.mxu0 0
    %2349 = vmatpush.bf16.msra.mxu0 0
    %2350 = vmatpush.bf16.msra.mxu0 0
    %2351 = vmatpush.bf16.msra.mxu0 %v2293
    %2352 = vmatpush.bf16.msra.mxu0 %v2292
    %2353 = vmatmul.bf16.gmra.mxu0 %v2305
    %v2354 = vpop.f32.mrf.mxu0
    %v2355 = vadd.f32 %v2326, %v2354
    %v2356 = vpop.f32.mrf.mxu0
    %v2357 = vadd.f32 %v2328, %v2356
    %2358 = vmatmul.bf16.gmra.mxu0 %v2308
    %v2359 = vpop.f32.mrf.mxu0
    %v2360 = vadd.f32 %v2331, %v2359
    %v2361 = vpop.f32.mrf.mxu0
    %v2362 = vadd.f32 %v2333, %v2361
    %2363 = vmatmul.bf16.gmra.mxu0 %v2311
    %v2364 = vpop.f32.mrf.mxu0
    %v2365 = vadd.f32 %v2336, %v2364
    %v2366 = vpop.f32.mrf.mxu0
    %v2367 = vadd.f32 %v2338, %v2366
    %2368 = vmatmul.bf16.gmra.mxu0 %v2314
    %v2369 = vpop.f32.mrf.mxu0
    %v2370 = vadd.f32 %v2341, %v2369
    %v2371 = vpop.f32.mrf.mxu0
    %v2372 = vadd.f32 %v2343, %v2371
    %2373 = vdwg.mxu0
    %v2374 = vadd.f32 %v2175, %v2355
    %v2375 = vadd.f32 %v2176, %v2357
    %v2376 = vadd.f32 %v2177, %v2360
    %v2377 = vadd.f32 %v2178, %v2362
    %v2378 = vadd.f32 %v2179, %v2365
    %v2379 = vadd.f32 %v2180, %v2367
    %v2380 = vadd.f32 %v2181, %v2370
    %v2381 = vadd.f32 %v2182, %v2372
    %v2382 = vld [vmem:[#allocation2 + $0x40] sm:$0xff]
    %v2383 = vld [vmem:[#allocation2 + $0x48] sm:$0xff]
    %v2384 = vld [vmem:[#allocation2 + $0x50] sm:$0xff]
    %v2385 = vld [vmem:[#allocation2 + $0x58] sm:$0xff]
    %v2386 = vld [vmem:[#allocation2 + $0x60] sm:$0xff]
    %v2387 = vld [vmem:[#allocation2 + $0x68] sm:$0xff]
    %v2388 = vld [vmem:[#allocation2 + $0x70] sm:$0xff]
    %v2389 = vld [vmem:[#allocation2 + $0x78] sm:$0xff]
    %v2390 = vld [vmem:[#allocation2 + $0x80] sm:$0xff]
    %v2391 = vld [vmem:[#allocation2 + $0x88] sm:$0xff]
    %v2392 = vld [vmem:[#allocation2 + $0x90] sm:$0xff]
    %v2393 = vld [vmem:[#allocation2 + $0x98] sm:$0xff]
    %v2394 = vld [vmem:[#allocation2 + $0xa0] sm:$0xff]
    %v2395 = vld [vmem:[#allocation2 + $0xa8] sm:$0xff]
    %v2396 = vld [vmem:[#allocation2 + $0xb0] sm:$0xff]
    %v2397 = vld [vmem:[#allocation2 + $0xb8] sm:$0xff]
    %v2398 = vmul.f32 %v2382, %v134
    %v2399 = vmul.f32 %v2383, %v135
    %v2400 = vmul.f32 %v2384, %v136
    %v2401 = vmul.f32 %v2385, %v137
    %v2402 = vmul.f32 %v2386, %v138
    %v2403 = vmul.f32 %v2387, %v139
    %v2404 = vmul.f32 %v2388, %v140
    %v2405 = vmul.f32 %v2389, %v141
    %v2406 = vmul.f32 %v2390, %v142
    %v2407 = vmul.f32 %v2391, %v143
    %v2408 = vmul.f32 %v2392, %v144
    %v2409 = vmul.f32 %v2393, %v145
    %v2410 = vmul.f32 %v2394, %v146
    %v2411 = vmul.f32 %v2395, %v147
    %v2412 = vmul.f32 %v2396, %v148
    %v2413 = vmul.f32 %v2397, %v149
    %v2414 = vpack.c.bf16 %v2400, %v2398
    %v2415 = vpack.c.bf16 %v2401, %v2399
    %v2416 = vpack.c.bf16 %v2404, %v2402
    %v2417 = vpack.c.bf16 %v2405, %v2403
    %v2418 = vpack.c.bf16 %v2408, %v2406
    %v2419 = vpack.c.bf16 %v2409, %v2407
    %v2420 = vpack.c.bf16 %v2412, %v2410
    %v2421 = vpack.c.bf16 %v2413, %v2411
    %s2422 = scalar_lea.vmem %s3, 320
    %v2423 = vld [vmem:[%s2422] sm:$0xf]
    %v2424 = vld [vmem:[%s2422 + $0x4] sm:$0xf]
    %v2425 = vld [vmem:[%s2422 + $0x8] sm:$0xf]
    %v2426 = vld [vmem:[%s2422 + $0xc] sm:$0xf]
    %v2427 = vld [vmem:[%s2422 + $0x10] sm:$0xf]
    %v2428 = vld [vmem:[%s2422 + $0x14] sm:$0xf]
    %v2429 = vld [vmem:[%s2422 + $0x18] sm:$0xf]
    %v2430 = vld [vmem:[%s2422 + $0x1c] sm:$0xf]
    %v2431 = vld [vmem:[%s2422 + $0x20] sm:$0xf]
    %v2432 = vld [vmem:[%s2422 + $0x24] sm:$0xf]
    %v2433 = vld [vmem:[%s2422 + $0x28] sm:$0xf]
    %v2434 = vld [vmem:[%s2422 + $0x2c] sm:$0xf]
    %v2435 = vld [vmem:[%s2422 + $0x30] sm:$0xf]
    %v2436 = vld [vmem:[%s2422 + $0x34] sm:$0xf]
    %v2437 = vld [vmem:[%s2422 + $0x38] sm:$0xf]
    %v2438 = vld [vmem:[%s2422 + $0x3c] sm:$0xf]
    %v2439 = vld [vmem:[%s2422 + $0x40] sm:$0xf]
    %v2440 = vld [vmem:[%s2422 + $0x44] sm:$0xf]
    %v2441 = vld [vmem:[%s2422 + $0x48] sm:$0xf]
    %v2442 = vld [vmem:[%s2422 + $0x4c] sm:$0xf]
    %v2463 = vunpack.c.l.b16 %v2423
    %v2464 = vunpack.c.l.b16 %v2424
    %v2465 = vunpack.c.l.b16 %v2425
    %v2466 = vunpack.c.l.b16 %v2426
    %v2467 = vunpack.c.l.b16 %v2427
    %v2468 = vunpack.c.l.b16 %v2428
    %v2469 = vunpack.c.l.b16 %v2429
    %v2470 = vunpack.c.l.b16 %v2430
    %v2471 = vunpack.c.l.b16 %v2431
    %v2472 = vunpack.c.l.b16 %v2432
    %v2473 = vunpack.c.l.b16 %v2433
    %v2474 = vunpack.c.l.b16 %v2434
    %v2475 = vunpack.c.l.b16 %v2435
    %v2476 = vunpack.c.l.b16 %v2436
    %v2477 = vunpack.c.l.b16 %v2437
    %v2478 = vunpack.c.l.b16 %v2438
    %v2479 = vunpack.c.l.b16 %v2439
    %v2480 = vunpack.c.l.b16 %v2440
    %v2481 = vunpack.c.l.b16 %v2441
    %v2482 = vunpack.c.l.b16 %v2442
    %v2483 = vpack.c.b16 %v2464, %v2463
    %v2484 = vpack.c.b16 %v2466, %v2465
    %v2485 = vpack.c.b16 %v2468, %v2467
    %v2486 = vpack.c.b16 %v2470, %v2469
    %v2487 = vpack.c.b16 %v2472, %v2471
    %v2488 = vpack.c.b16 %v2474, %v2473
    %v2489 = vpack.c.b16 %v2476, %v2475
    %v2490 = vpack.c.b16 %v2478, %v2477
    %v2491 = vpack.c.b16 %v2480, %v2479
    %v2492 = vpack.c.b16 %v2482, %v2481
    %v2504 = vsel %vm29, %v2415, 0
    %v2507 = vsel %vm29, %v2417, 0
    %v2510 = vsel %vm29, %v2419, 0
    %v2513 = vsel %vm29, %v2421, 0
    %2515 = vmatpush.bf16.msra.mxu0 %v2490
    %2516 = vmatpush.bf16.msra.mxu0 %v2489
    %2517 = vmatpush.bf16.msra.mxu0 %v2488
    %2518 = vmatpush.bf16.msra.mxu0 %v2487
    %2519 = vmatpush.bf16.msra.mxu0 %v2486
    %2520 = vmatpush.bf16.msra.mxu0 %v2485
    %2521 = vmatpush.bf16.msra.mxu0 %v2484
    %2522 = vmatpush.bf16.msra.mxu0 %v2483
    %2523 = vmatmul.bf16.gmra.mxu0 %v2414
    %v2524 = vpop.f32.mrf.mxu0
    %v2525 = vadd.f32 0.0, %v2524
    %v2526 = vpop.f32.mrf.mxu0
    %v2527 = vadd.f32 0.0, %v2526
    %2528 = vmatmul.bf16.gmra.mxu0 %v2416
    %v2529 = vpop.f32.mrf.mxu0
    %v2530 = vadd.f32 0.0, %v2529
    %v2531 = vpop.f32.mrf.mxu0
    %v2532 = vadd.f32 0.0, %v2531
    %2533 = vmatmul.bf16.gmra.mxu0 %v2418
    %v2534 = vpop.f32.mrf.mxu0
    %v2535 = vadd.f32 0.0, %v2534
    %v2536 = vpop.f32.mrf.mxu0
    %v2537 = vadd.f32 0.0, %v2536
    %2538 = vmatmul.bf16.gmra.mxu0 %v2420
    %v2539 = vpop.f32.mrf.mxu0
    %v2540 = vadd.f32 0.0, %v2539
    %v2541 = vpop.f32.mrf.mxu0
    %v2542 = vadd.f32 0.0, %v2541
    %2543 = vdwg.mxu0
    %2544 = vmatpush.bf16.msra.mxu0 0
    %2545 = vmatpush.bf16.msra.mxu0 0
    %2546 = vmatpush.bf16.msra.mxu0 0
    %2547 = vmatpush.bf16.msra.mxu0 0
    %2548 = vmatpush.bf16.msra.mxu0 0
    %2549 = vmatpush.bf16.msra.mxu0 0
    %2550 = vmatpush.bf16.msra.mxu0 %v2492
    %2551 = vmatpush.bf16.msra.mxu0 %v2491
    %2552 = vmatmul.bf16.gmra.mxu0 %v2504
    %v2553 = vpop.f32.mrf.mxu0
    %v2554 = vadd.f32 %v2525, %v2553
    %v2555 = vpop.f32.mrf.mxu0
    %v2556 = vadd.f32 %v2527, %v2555
    %2557 = vmatmul.bf16.gmra.mxu0 %v2507
    %v2558 = vpop.f32.mrf.mxu0
    %v2559 = vadd.f32 %v2530, %v2558
    %v2560 = vpop.f32.mrf.mxu0
    %v2561 = vadd.f32 %v2532, %v2560
    %2562 = vmatmul.bf16.gmra.mxu0 %v2510
    %v2563 = vpop.f32.mrf.mxu0
    %v2564 = vadd.f32 %v2535, %v2563
    %v2565 = vpop.f32.mrf.mxu0
    %v2566 = vadd.f32 %v2537, %v2565
    %2567 = vmatmul.bf16.gmra.mxu0 %v2513
    %v2568 = vpop.f32.mrf.mxu0
    %v2569 = vadd.f32 %v2540, %v2568
    %v2570 = vpop.f32.mrf.mxu0
    %v2571 = vadd.f32 %v2542, %v2570
    %2572 = vdwg.mxu0
    %v2573 = vadd.f32 %v2374, %v2554
    %v2574 = vadd.f32 %v2375, %v2556
    %v2575 = vadd.f32 %v2376, %v2559
    %v2576 = vadd.f32 %v2377, %v2561
    %v2577 = vadd.f32 %v2378, %v2564
    %v2578 = vadd.f32 %v2379, %v2566
    %v2579 = vadd.f32 %v2380, %v2569
    %v2580 = vadd.f32 %v2381, %v2571
    %v2581 = vmax.f32 %v2573, 0.0
    %v2582 = vmax.f32 %v2574, 0.0
    %v2583 = vmax.f32 %v2575, 0.0
    %v2584 = vmax.f32 %v2576, 0.0
    %v2585 = vmax.f32 %v2577, 0.0
    %v2586 = vmax.f32 %v2578, 0.0
    %v2587 = vmax.f32 %v2579, 0.0
    %v2588 = vmax.f32 %v2580, 0.0
    %v2589 = vld [vmem:[%s4] sm:$0xff]
    %v2590 = vld [vmem:[%s4 + $0x8] sm:$0xff]
    %v2591 = vld [vmem:[%s4 + $0x10] sm:$0xff]
    %v2592 = vld [vmem:[%s4 + $0x18] sm:$0xff]
    %v2593 = vld [vmem:[%s4 + $0x20] sm:$0xff]
    %v2594 = vld [vmem:[%s4 + $0x28] sm:$0xff]
    %v2595 = vld [vmem:[%s4 + $0x30] sm:$0xff]
    %v2596 = vld [vmem:[%s4 + $0x38] sm:$0xff]
    %v2597 = vmul.f32 %v2581, %v2589
    %v2598 = vmul.f32 %v2582, %v2590
    %v2599 = vmul.f32 %v2583, %v2591
    %v2600 = vmul.f32 %v2584, %v2592
    %v2601 = vmul.f32 %v2585, %v2593
    %v2602 = vmul.f32 %v2586, %v2594
    %v2603 = vmul.f32 %v2587, %v2595
    %v2604 = vmul.f32 %v2588, %v2596
    %v2605 = vsel %vm29, %v2597, 0.0
    %v2606 = vsel %vm29, %v2598, 0.0
    %v2607 = vadd.f32 %v2605, %v2606
    %v2608 = vsel %vm29, %v2599, 0.0
    %v2609 = vadd.f32 %v2607, %v2608
    %v2610 = vsel %vm29, %v2600, 0.0
    %v2611 = vadd.f32 %v2609, %v2610
    %v2612 = vsel %vm29, %v2601, 0.0
    %v2613 = vadd.f32 %v2611, %v2612
    %v2614 = vsel %vm29, %v2602, 0.0
    %v2615 = vadd.f32 %v2613, %v2614
    %v2616 = vsel %vm29, %v2603, 0.0
    %v2617 = vadd.f32 %v2615, %v2616
    %v2618 = vsel %vm29, %v2604, 0.0
    %v2619 = vadd.f32 %v2617, %v2618
    %v2620 = vrot.slane %v2619, 4
    %v2621 = vadd.f32 %v2619, %v2620
    %v2622 = vrot.slane %v2621, 2
    %v2623 = vadd.f32 %v2621, %v2622
    %v2624 = vrot.slane %v2623, 1
    %v2625 = vadd.f32 %v2623, %v2624
    %v2626 = vsel %vm29, %v2625, 0.0
    %2627 = vadd.xlane.f32.xlu0 %v2626
    %v2628 = vpop.xlane.xlu0 %2627
    %v2629 = vld [vmem:[%s5 + $0x3] sm:$0x1]
    %v2630 = vadd.f32 %v2628, %v2629
    %vm2631 = vcmask 0
    %2632 = vst.msk [vmem:[#allocation3] sm:$0x1] %vm2631, %v2630
    // Predicated region
    $region30: #{critic1_forward.1} parent=1 // pred_check
      _
    $region31: #{critic1_forward.1} parent=1 // pred_check_branch
      %2634 = sbr.rel (0) target = $region33
    $region32: #{critic1_forward.1} parent=1 // pred_region
      %2636 = vsyncadd [#allocation4], 0
      %s2638 = sshll.u32 [#allocation3], 4
      %s2639 = int_to_ptr.vmem [resolvable:$true] %s2638
      %s2640 = sshll.u32 %s7, 4
      %s2641 = int_to_ptr.hbm [resolvable:$true] %s2640
      %2643 = dma.vmem_to_hbm [thread:$0]  %s2639, 16, %s2641, [#allocation4]
    $region33: #{critic1_forward.1} parent=1 // pred_fallthru
      _
    // Predicated region
    $region34: #{critic1_forward.1} parent=1 // pred_check
      _
    $region35: #{critic1_forward.1} parent=1 // pred_check_branch
      %2645 = sbr.rel (0) target = $region37
    $region36: #{critic1_forward.1} parent=1 // pred_region
      %2647 = dma.done [#allocation4], 16
    $region37: #{critic1_forward.1} parent=1 // pred_fallthru
      _
    %2648 = vsyncpa [#allocation4], 1

</llo_original>
